<compile_context>
chip_gen: v7x
topology: tpu7x:2x2x1
jax: 0.10.0
libtpu: 0.0.40
codegen_flags: <defaults>
</compile_context>

<pallas_src>
import math

import jax
import jax.numpy as jnp
from jax.experimental import pallas as pl
from jax.experimental.pallas import tpu as pltpu

EXP_MODS_LSTM_IDX = 0
EXP_NN_DROPOUT = 0.0  # nn.LSTM dropout is a no-op at inference; not applied.


def _make_lstm_kernel(num_layers, seq_len, batch_p, hidden):
    """Build a kernel closed over static num_layers / seq_len / padded batch."""
    H = hidden
    H3 = 3 * H
    H4 = 4 * H

    def kernel(*refs):
        # inputs: x (T, BP, I), h0 (L, 1, H), c0 (L, 1, H),
        #         layer 0: w_ih0 (I, 4H), w_hh0 (H, 4H), b0 (1, 4H),
        #         layers l>=1: w_cat_l (2H, 4H), b_l (1, 4H),
        #         w_lin (H, O), b_lin (1, O)
        # outputs: out (BP, O)
        x_ref, h0_ref, c0_ref = refs[0], refs[1], refs[2]
        idx = 3
        wih0_ref, whh0_ref, b0_ref = refs[idx], refs[idx + 1], refs[idx + 2]
        idx += 3
        wcat_refs, bup_refs = [], []
        for _ in range(1, num_layers):
            wcat_refs.append(refs[idx])
            bup_refs.append(refs[idx + 1])
            idx += 2
        w_lin_ref, b_lin_ref = refs[idx], refs[idx + 1]
        out_ref = refs[idx + 2]

        # Hoist loop-invariant weights / pre-broadcast biases once (they fit
        # comfortably in the vreg file at H=32, L=2).
        whh0 = whh0_ref[...]                               # (H, 4H)
        wcat = [r[...] for r in wcat_refs]                 # each (2H, 4H)
        bias_up = [
            jnp.broadcast_to(r[...], (batch_p, H4)) for r in bup_refs
        ]

        # Layer-0 input projection for all timesteps in one wide matmul,
        # with the layer-0 bias folded in (off the serial recurrence chain).
        x_all = x_ref[...]                                 # (T, BP, I)
        x_flat = x_all.reshape(seq_len * batch_p, x_all.shape[-1])
        xproj = (
            jnp.dot(x_flat, wih0_ref[...], preferred_element_type=jnp.float32)
            + b0_ref[...]
        ).reshape(seq_len, batch_p, H4)                    # (T, BP, 4H)

        # Recurrent state lives in vregs across the fully-unrolled time loop.
        # h0/c0 arrive as (L, 1, H); sublane-broadcast in-kernel is ~free.
        h_list = [
            jnp.broadcast_to(h0_ref[l], (batch_p, H)) for l in range(num_layers)
        ]
        c_list = [
            jnp.broadcast_to(c0_ref[l], (batch_p, H)) for l in range(num_layers)
        ]

        for t in range(seq_len):
            layer_in = None
            for l in range(num_layers):
                if l == 0:
                    gates = xproj[t] + jnp.dot(
                        h_list[0], whh0, preferred_element_type=jnp.float32)
                else:
                    # K-concat fused dot: [x | h] @ [w_ih ; w_hh], one MXU pass
                    # (K = 2H = 64) instead of two dependent dots + add.
                    xh = jnp.concatenate([layer_in, h_list[l]], axis=-1)
                    gates = (
                        jnp.dot(xh, wcat[l - 1],
                                preferred_element_type=jnp.float32)
                        + bias_up[l - 1]
                    )
                # Gate order along 4H is (i, f, o, g): one sigmoid over the
                # first 3H lanes, one tanh over the last H lanes.
                sig = jax.nn.sigmoid(gates[:, :H3])
                i_g = sig[:, :H]
                f_g = sig[:, H:2 * H]
                o_g = sig[:, 2 * H:]
                g_g = jnp.tanh(gates[:, H3:])

                c_new = f_g * c_list[l] + i_g * g_g
                h_new = o_g * jnp.tanh(c_new)

                h_list[l] = h_new
                c_list[l] = c_new
                layer_in = h_new

        # Linear head on the last timestep's top-layer hidden state.
        # TODO(synk): on v6e/v7x (256-wide MXU) this could be folded into the
        # last step's fused weight (4H + O = 136 <= 256); kept separate here.
        h_top = h_list[num_layers - 1]                     # (BP, H)
        pred = (
            jnp.dot(h_top, w_lin_ref[...], preferred_element_type=jnp.float32)
            + b_lin_ref[...]
        )
        out_ref[...] = pred.astype(out_ref.dtype)

    return kernel


class LSTM:
    """JAX/Pallas re-implementation of the PyTorch LSTM module's forward."""

    def __init__(self, input_size, hidden_size, num_layers, output_size,
                 batch_size, key):
        self.input_size = input_size
        self.hidden_size = hidden_size
        self.num_layers = num_layers
        self.output_size = output_size
        self.num_directions = 1
        self.batch_size = batch_size

        keys = jax.random.split(key, 2 + 4 * num_layers + 2)
        ki = iter(keys)

        # xavier_normal_ with gain=calculate_gain('relu')=sqrt(2) on (L, 1, H):
        # fan_in = 1 * H, fan_out = L * H
        gain = math.sqrt(2.0)
        std = gain * math.sqrt(2.0 / (hidden_size + num_layers * hidden_size))
        self.h0 = std * jax.random.normal(
            next(ki), (num_layers, 1, hidden_size), jnp.float32)
        self.c0 = std * jax.random.normal(
            next(ki), (num_layers, 1, hidden_size), jnp.float32)

        # nn.LSTM default init: U(-1/sqrt(H), 1/sqrt(H)); PyTorch stores gates
        # in order (i, f, g, o). We fuse per layer along the 4H axis with the
        # kernel's gate order (i, f, o, g). Layer 0 keeps separate
        # w_ih0 (I,4H) / w_hh0 (H,4H); upper layers are K-concat packed to
        # (2H, 4H) so the kernel does one dot per step.
        bound = 1.0 / math.sqrt(hidden_size)
        order = (0, 1, 3, 2)  # (i, f, g, o) -> (i, f, o, g)
        self.w_cat, self.b_up = [], []
        for l in range(num_layers):
            in_dim = input_size if l == 0 else hidden_size
            w_ih_g = jax.random.uniform(
                next(ki), (4, in_dim, hidden_size), jnp.float32, -bound, bound)
            w_hh_g = jax.random.uniform(
                next(ki), (4, hidden_size, hidden_size), jnp.float32,
                -bound, bound)
            b_ih = jax.random.uniform(
                next(ki), (4, hidden_size), jnp.float32, -bound, bound)
            b_hh = jax.random.uniform(
                next(ki), (4, hidden_size), jnp.float32, -bound, bound)
            b_sum = b_ih + b_hh  # biases always appear summed in the cell

            w_ih_f = jnp.concatenate([w_ih_g[k] for k in order], axis=-1)
            w_hh_f = jnp.concatenate([w_hh_g[k] for k in order], axis=-1)
            b_f = jnp.concatenate([b_sum[k] for k in order], axis=-1)[None, :]

            if l == 0:
                self.w_ih0 = w_ih_f          # (I, 4H)
                self.w_hh0 = w_hh_f          # (H, 4H)
                self.b0 = b_f                # (1, 4H)
            else:
                self.w_cat.append(
                    jnp.concatenate([w_ih_f, w_hh_f], axis=0))  # (2H, 4H)
                self.b_up.append(b_f)                           # (1, 4H)

        # nn.Linear(hidden, output): stored transposed as (H, O)
        lin_bound = 1.0 / math.sqrt(hidden_size)
        self.w_lin = jax.random.uniform(
            next(ki), (hidden_size, output_size), jnp.float32,
            -lin_bound, lin_bound)
        self.b_lin = jax.random.uniform(
            next(ki), (1, output_size), jnp.float32, -lin_bound, lin_bound)

        # Jit the whole forward path (pad/transpose/pallas_call/slice) so the
        # layout plumbing fuses and per-op dispatch overhead disappears.
        self._forward = jax.jit(self._forward_impl)

    def _forward_impl(self, x):
        B, T, _ = x.shape
        L, H, O = self.num_layers, self.hidden_size, self.output_size

        # Pad batch to a multiple of 8 sublanes; padded rows are discarded.
        BP = max(8, ((B + 7) // 8) * 8)
        x = x.astype(jnp.float32)
        if BP != B:
            x = jnp.pad(x, ((0, BP - B), (0, 0), (0, 0)))
        x_tm = jnp.transpose(x, (1, 0, 2))               # (T, BP, I)

        args = [x_tm, self.h0, self.c0, self.w_ih0, self.w_hh0, self.b0]
        for l in range(1, L):
            args += [self.w_cat[l - 1], self.b_up[l - 1]]
        args += [self.w_lin, self.b_lin]

        vmem = pl.BlockSpec(memory_space=pltpu.MemorySpace.VMEM)
        pred = pl.pallas_call(
            _make_lstm_kernel(L, T, BP, H),
            out_shape=jax.ShapeDtypeStruct((BP, O), jnp.float32),
            in_specs=[vmem] * len(args),
            out_specs=vmem,
        )(*args)
        return pred[:B]  # (B, O) == pred[:, -1, :] of the per-step linear

    def __call__(self, input_seq):
        # Mirrors: input_seq = input_seq[EXP_MODS_LSTM_IDX][0]
        x = input_seq[EXP_MODS_LSTM_IDX][0]  # (B, T, I), batch_first
        return self._forward(x)


if __name__ == "__main__":
    batch, seq_len, input_size = 2, 8, 16
    hidden_size, num_layers, output_size = 32, 2, 8

    key = jax.random.PRNGKey(0)
    k_param, k_data = jax.random.split(key)

    model = LSTM(input_size, hidden_size, num_layers, output_size, batch,
                 k_param)

    x = jax.random.normal(k_data, (batch, seq_len, input_size), jnp.float32)
    input_seq = [(x,)]  # forward indexes input_seq[EXP_MODS_LSTM_IDX][0]

    out = model(input_seq)
    jax.block_until_ready(out)
    assert out.shape == (batch, output_size)
    print("KERNEL_OK")
</pallas_src>

<mosaic_0001>
module attributes {stable_mosaic.version = 11 : i64} {
  func.func @kernel(%arg0: memref<8x8x16xf32, #tpu.memory_space<vmem>>, %arg1: memref<2x1x32xf32, #tpu.memory_space<vmem>>, %arg2: memref<2x1x32xf32, #tpu.memory_space<vmem>>, %arg3: memref<16x128xf32, #tpu.memory_space<vmem>>, %arg4: memref<32x128xf32, #tpu.memory_space<vmem>>, %arg5: memref<1x128xf32, #tpu.memory_space<vmem>>, %arg6: memref<64x128xf32, #tpu.memory_space<vmem>>, %arg7: memref<1x128xf32, #tpu.memory_space<vmem>>, %arg8: memref<32x8xf32, #tpu.memory_space<vmem>>, %arg9: memref<1x8xf32, #tpu.memory_space<vmem>>, %arg10: memref<8x8xf32, #tpu.memory_space<vmem>>) attributes {dimension_semantics = [], scalar_prefetch = 0 : i64, scratch_operands = 0 : i64, tpu.core_type = #tpu.core_type<tc>} {
    %c0 = arith.constant 0 : index
    %c0_0 = arith.constant 0 : index
    %0 = vector.load %arg4[%c0, %c0_0] : memref<32x128xf32, #tpu.memory_space<vmem>>, vector<32x128xf32>
    %c0_1 = arith.constant 0 : index
    %c0_2 = arith.constant 0 : index
    %1 = vector.load %arg6[%c0_1, %c0_2] : memref<64x128xf32, #tpu.memory_space<vmem>>, vector<64x128xf32>
    %c0_3 = arith.constant 0 : index
    %c0_4 = arith.constant 0 : index
    %2 = vector.load %arg7[%c0_3, %c0_4] : memref<1x128xf32, #tpu.memory_space<vmem>>, vector<1x128xf32>
    %3 = vector.shape_cast %2 : vector<1x128xf32> to vector<1x128xf32>
    %4 = vector.broadcast %3 : vector<1x128xf32> to vector<8x128xf32>
    %c0_5 = arith.constant 0 : index
    %c0_6 = arith.constant 0 : index
    %c0_7 = arith.constant 0 : index
    %5 = vector.load %arg0[%c0_5, %c0_6, %c0_7] : memref<8x8x16xf32, #tpu.memory_space<vmem>>, vector<8x8x16xf32>
    %6 = vector.shape_cast %5 : vector<8x8x16xf32> to vector<64x16xf32>
    %c0_8 = arith.constant 0 : index
    %c0_9 = arith.constant 0 : index
    %7 = vector.load %arg3[%c0_8, %c0_9] : memref<16x128xf32, #tpu.memory_space<vmem>>, vector<16x128xf32>
    %cst = arith.constant dense<0.000000e+00> : vector<64x128xf32>
    %8 = tpu.matmul %6, %7, %cst {dimension_numbers = #tpu.dot_dimension_numbers<[1], [0], [0], [1], [0, 0, 1, 1], [], []>} : vector<64x16xf32>, vector<16x128xf32>, vector<64x128xf32> -> vector<64x128xf32>
    %c0_10 = arith.constant 0 : index
    %c0_11 = arith.constant 0 : index
    %9 = vector.load %arg5[%c0_10, %c0_11] : memref<1x128xf32, #tpu.memory_space<vmem>>, vector<1x128xf32>
    %10 = vector.broadcast %9 : vector<1x128xf32> to vector<64x128xf32>
    %11 = arith.addf %8, %10 : vector<64x128xf32>
    %12 = vector.shape_cast %11 : vector<64x128xf32> to vector<8x8x128xf32>
    %c0_12 = arith.constant 0 : index
    %c0_13 = arith.constant 0 : index
    %c0_14 = arith.constant 0 : index
    %13 = vector.load %arg1[%c0_12, %c0_13, %c0_14] : memref<2x1x32xf32, #tpu.memory_space<vmem>>, vector<1x1x32xf32>
    %14 = vector.shape_cast %13 : vector<1x1x32xf32> to vector<1x32xf32>
    %15 = vector.shape_cast %14 : vector<1x32xf32> to vector<1x32xf32>
    %16 = vector.broadcast %15 : vector<1x32xf32> to vector<8x32xf32>
    %c1 = arith.constant 1 : index
    %c0_15 = arith.constant 0 : index
    %c0_16 = arith.constant 0 : index
    %17 = vector.load %arg1[%c1, %c0_15, %c0_16] : memref<2x1x32xf32, #tpu.memory_space<vmem>>, vector<1x1x32xf32>
    %18 = vector.shape_cast %17 : vector<1x1x32xf32> to vector<1x32xf32>
    %19 = vector.shape_cast %18 : vector<1x32xf32> to vector<1x32xf32>
    %20 = vector.broadcast %19 : vector<1x32xf32> to vector<8x32xf32>
    %c0_17 = arith.constant 0 : index
    %c0_18 = arith.constant 0 : index
    %c0_19 = arith.constant 0 : index
    %21 = vector.load %arg2[%c0_17, %c0_18, %c0_19] : memref<2x1x32xf32, #tpu.memory_space<vmem>>, vector<1x1x32xf32>
    %22 = vector.shape_cast %21 : vector<1x1x32xf32> to vector<1x32xf32>
    %23 = vector.shape_cast %22 : vector<1x32xf32> to vector<1x32xf32>
    %24 = vector.broadcast %23 : vector<1x32xf32> to vector<8x32xf32>
    %c1_20 = arith.constant 1 : index
    %c0_21 = arith.constant 0 : index
    %c0_22 = arith.constant 0 : index
    %25 = vector.load %arg2[%c1_20, %c0_21, %c0_22] : memref<2x1x32xf32, #tpu.memory_space<vmem>>, vector<1x1x32xf32>
    %26 = vector.shape_cast %25 : vector<1x1x32xf32> to vector<1x32xf32>
    %27 = vector.shape_cast %26 : vector<1x32xf32> to vector<1x32xf32>
    %28 = vector.broadcast %27 : vector<1x32xf32> to vector<8x32xf32>
    %29 = vector.extract_strided_slice %12 {offsets = [0, 0, 0], sizes = [1, 8, 128], strides = [1, 1, 1]} : vector<8x8x128xf32> to vector<1x8x128xf32>
    %30 = vector.shape_cast %29 : vector<1x8x128xf32> to vector<8x128xf32>
    %cst_23 = arith.constant dense<0.000000e+00> : vector<8x128xf32>
    %31 = tpu.matmul %16, %0, %cst_23 {dimension_numbers = #tpu.dot_dimension_numbers<[1], [0], [0], [1], [0, 0, 1, 1], [], []>} : vector<8x32xf32>, vector<32x128xf32>, vector<8x128xf32> -> vector<8x128xf32>
    %32 = arith.addf %30, %31 : vector<8x128xf32>
    %33 = vector.extract_strided_slice %32 {offsets = [0, 0], sizes = [8, 96], strides = [1, 1]} : vector<8x128xf32> to vector<8x96xf32>
    %34 = arith.negf %33 : vector<8x96xf32>
    %35 = math.exp %34 : vector<8x96xf32>
    %cst_24 = arith.constant 1.000000e+00 : f32
    %36 = vector.broadcast %cst_24 : f32 to vector<8x96xf32>
    %37 = arith.addf %36, %35 : vector<8x96xf32>
    %38 = arith.divf %36, %37 : vector<8x96xf32>
    %39 = vector.extract_strided_slice %38 {offsets = [0, 0], sizes = [8, 32], strides = [1, 1]} : vector<8x96xf32> to vector<8x32xf32>
    %40 = vector.extract_strided_slice %38 {offsets = [0, 32], sizes = [8, 32], strides = [1, 1]} : vector<8x96xf32> to vector<8x32xf32>
    %41 = vector.extract_strided_slice %38 {offsets = [0, 64], sizes = [8, 32], strides = [1, 1]} : vector<8x96xf32> to vector<8x32xf32>
    %42 = vector.extract_strided_slice %32 {offsets = [0, 96], sizes = [8, 32], strides = [1, 1]} : vector<8x128xf32> to vector<8x32xf32>
    %43 = math.tanh %42 : vector<8x32xf32>
    %44 = arith.mulf %40, %24 : vector<8x32xf32>
    %45 = arith.mulf %39, %43 : vector<8x32xf32>
    %46 = arith.addf %44, %45 : vector<8x32xf32>
    %47 = math.tanh %46 : vector<8x32xf32>
    %48 = arith.mulf %41, %47 : vector<8x32xf32>
    %49 = tpu.concatenate %48, %20 in 1 : vector<8x32xf32>, vector<8x32xf32> -> vector<8x64xf32>
    %cst_25 = arith.constant dense<0.000000e+00> : vector<8x128xf32>
    %50 = tpu.matmul %49, %1, %cst_25 {dimension_numbers = #tpu.dot_dimension_numbers<[1], [0], [0], [1], [0, 0, 1, 1], [], []>} : vector<8x64xf32>, vector<64x128xf32>, vector<8x128xf32> -> vector<8x128xf32>
    %51 = arith.addf %50, %4 : vector<8x128xf32>
    %52 = vector.extract_strided_slice %51 {offsets = [0, 0], sizes = [8, 96], strides = [1, 1]} : vector<8x128xf32> to vector<8x96xf32>
    %53 = arith.negf %52 : vector<8x96xf32>
    %54 = math.exp %53 : vector<8x96xf32>
    %cst_26 = arith.constant 1.000000e+00 : f32
    %55 = vector.broadcast %cst_26 : f32 to vector<8x96xf32>
    %56 = arith.addf %55, %54 : vector<8x96xf32>
    %57 = arith.divf %55, %56 : vector<8x96xf32>
    %58 = vector.extract_strided_slice %57 {offsets = [0, 0], sizes = [8, 32], strides = [1, 1]} : vector<8x96xf32> to vector<8x32xf32>
    %59 = vector.extract_strided_slice %57 {offsets = [0, 32], sizes = [8, 32], strides = [1, 1]} : vector<8x96xf32> to vector<8x32xf32>
    %60 = vector.extract_strided_slice %57 {offsets = [0, 64], sizes = [8, 32], strides = [1, 1]} : vector<8x96xf32> to vector<8x32xf32>
    %61 = vector.extract_strided_slice %51 {offsets = [0, 96], sizes = [8, 32], strides = [1, 1]} : vector<8x128xf32> to vector<8x32xf32>
    %62 = math.tanh %61 : vector<8x32xf32>
    %63 = arith.mulf %59, %28 : vector<8x32xf32>
    %64 = arith.mulf %58, %62 : vector<8x32xf32>
    %65 = arith.addf %63, %64 : vector<8x32xf32>
    %66 = math.tanh %65 : vector<8x32xf32>
    %67 = arith.mulf %60, %66 : vector<8x32xf32>
    %68 = vector.extract_strided_slice %12 {offsets = [1, 0, 0], sizes = [1, 8, 128], strides = [1, 1, 1]} : vector<8x8x128xf32> to vector<1x8x128xf32>
    %69 = vector.shape_cast %68 : vector<1x8x128xf32> to vector<8x128xf32>
    %cst_27 = arith.constant dense<0.000000e+00> : vector<8x128xf32>
    %70 = tpu.matmul %48, %0, %cst_27 {dimension_numbers = #tpu.dot_dimension_numbers<[1], [0], [0], [1], [0, 0, 1, 1], [], []>} : vector<8x32xf32>, vector<32x128xf32>, vector<8x128xf32> -> vector<8x128xf32>
    %71 = arith.addf %69, %70 : vector<8x128xf32>
    %72 = vector.extract_strided_slice %71 {offsets = [0, 0], sizes = [8, 96], strides = [1, 1]} : vector<8x128xf32> to vector<8x96xf32>
    %73 = arith.negf %72 : vector<8x96xf32>
    %74 = math.exp %73 : vector<8x96xf32>
    %cst_28 = arith.constant 1.000000e+00 : f32
    %75 = vector.broadcast %cst_28 : f32 to vector<8x96xf32>
    %76 = arith.addf %75, %74 : vector<8x96xf32>
    %77 = arith.divf %75, %76 : vector<8x96xf32>
    %78 = vector.extract_strided_slice %77 {offsets = [0, 0], sizes = [8, 32], strides = [1, 1]} : vector<8x96xf32> to vector<8x32xf32>
    %79 = vector.extract_strided_slice %77 {offsets = [0, 32], sizes = [8, 32], strides = [1, 1]} : vector<8x96xf32> to vector<8x32xf32>
    %80 = vector.extract_strided_slice %77 {offsets = [0, 64], sizes = [8, 32], strides = [1, 1]} : vector<8x96xf32> to vector<8x32xf32>
    %81 = vector.extract_strided_slice %71 {offsets = [0, 96], sizes = [8, 32], strides = [1, 1]} : vector<8x128xf32> to vector<8x32xf32>
    %82 = math.tanh %81 : vector<8x32xf32>
    %83 = arith.mulf %79, %46 : vector<8x32xf32>
    %84 = arith.mulf %78, %82 : vector<8x32xf32>
    %85 = arith.addf %83, %84 : vector<8x32xf32>
    %86 = math.tanh %85 : vector<8x32xf32>
    %87 = arith.mulf %80, %86 : vector<8x32xf32>
    %88 = tpu.concatenate %87, %67 in 1 : vector<8x32xf32>, vector<8x32xf32> -> vector<8x64xf32>
    %cst_29 = arith.constant dense<0.000000e+00> : vector<8x128xf32>
    %89 = tpu.matmul %88, %1, %cst_29 {dimension_numbers = #tpu.dot_dimension_numbers<[1], [0], [0], [1], [0, 0, 1, 1], [], []>} : vector<8x64xf32>, vector<64x128xf32>, vector<8x128xf32> -> vector<8x128xf32>
    %90 = arith.addf %89, %4 : vector<8x128xf32>
    %91 = vector.extract_strided_slice %90 {offsets = [0, 0], sizes = [8, 96], strides = [1, 1]} : vector<8x128xf32> to vector<8x96xf32>
    %92 = arith.negf %91 : vector<8x96xf32>
    %93 = math.exp %92 : vector<8x96xf32>
    %cst_30 = arith.constant 1.000000e+00 : f32
    %94 = vector.broadcast %cst_30 : f32 to vector<8x96xf32>
    %95 = arith.addf %94, %93 : vector<8x96xf32>
    %96 = arith.divf %94, %95 : vector<8x96xf32>
    %97 = vector.extract_strided_slice %96 {offsets = [0, 0], sizes = [8, 32], strides = [1, 1]} : vector<8x96xf32> to vector<8x32xf32>
    %98 = vector.extract_strided_slice %96 {offsets = [0, 32], sizes = [8, 32], strides = [1, 1]} : vector<8x96xf32> to vector<8x32xf32>
    %99 = vector.extract_strided_slice %96 {offsets = [0, 64], sizes = [8, 32], strides = [1, 1]} : vector<8x96xf32> to vector<8x32xf32>
    %100 = vector.extract_strided_slice %90 {offsets = [0, 96], sizes = [8, 32], strides = [1, 1]} : vector<8x128xf32> to vector<8x32xf32>
    %101 = math.tanh %100 : vector<8x32xf32>
    %102 = arith.mulf %98, %65 : vector<8x32xf32>
    %103 = arith.mulf %97, %101 : vector<8x32xf32>
    %104 = arith.addf %102, %103 : vector<8x32xf32>
    %105 = math.tanh %104 : vector<8x32xf32>
    %106 = arith.mulf %99, %105 : vector<8x32xf32>
    %107 = vector.extract_strided_slice %12 {offsets = [2, 0, 0], sizes = [1, 8, 128], strides = [1, 1, 1]} : vector<8x8x128xf32> to vector<1x8x128xf32>
    %108 = vector.shape_cast %107 : vector<1x8x128xf32> to vector<8x128xf32>
    %cst_31 = arith.constant dense<0.000000e+00> : vector<8x128xf32>
    %109 = tpu.matmul %87, %0, %cst_31 {dimension_numbers = #tpu.dot_dimension_numbers<[1], [0], [0], [1], [0, 0, 1, 1], [], []>} : vector<8x32xf32>, vector<32x128xf32>, vector<8x128xf32> -> vector<8x128xf32>
    %110 = arith.addf %108, %109 : vector<8x128xf32>
    %111 = vector.extract_strided_slice %110 {offsets = [0, 0], sizes = [8, 96], strides = [1, 1]} : vector<8x128xf32> to vector<8x96xf32>
    %112 = arith.negf %111 : vector<8x96xf32>
    %113 = math.exp %112 : vector<8x96xf32>
    %cst_32 = arith.constant 1.000000e+00 : f32
    %114 = vector.broadcast %cst_32 : f32 to vector<8x96xf32>
    %115 = arith.addf %114, %113 : vector<8x96xf32>
    %116 = arith.divf %114, %115 : vector<8x96xf32>
    %117 = vector.extract_strided_slice %116 {offsets = [0, 0], sizes = [8, 32], strides = [1, 1]} : vector<8x96xf32> to vector<8x32xf32>
    %118 = vector.extract_strided_slice %116 {offsets = [0, 32], sizes = [8, 32], strides = [1, 1]} : vector<8x96xf32> to vector<8x32xf32>
    %119 = vector.extract_strided_slice %116 {offsets = [0, 64], sizes = [8, 32], strides = [1, 1]} : vector<8x96xf32> to vector<8x32xf32>
    %120 = vector.extract_strided_slice %110 {offsets = [0, 96], sizes = [8, 32], strides = [1, 1]} : vector<8x128xf32> to vector<8x32xf32>
    %121 = math.tanh %120 : vector<8x32xf32>
    %122 = arith.mulf %118, %85 : vector<8x32xf32>
    %123 = arith.mulf %117, %121 : vector<8x32xf32>
    %124 = arith.addf %122, %123 : vector<8x32xf32>
    %125 = math.tanh %124 : vector<8x32xf32>
    %126 = arith.mulf %119, %125 : vector<8x32xf32>
    %127 = tpu.concatenate %126, %106 in 1 : vector<8x32xf32>, vector<8x32xf32> -> vector<8x64xf32>
    %cst_33 = arith.constant dense<0.000000e+00> : vector<8x128xf32>
    %128 = tpu.matmul %127, %1, %cst_33 {dimension_numbers = #tpu.dot_dimension_numbers<[1], [0], [0], [1], [0, 0, 1, 1], [], []>} : vector<8x64xf32>, vector<64x128xf32>, vector<8x128xf32> -> vector<8x128xf32>
    %129 = arith.addf %128, %4 : vector<8x128xf32>
    %130 = vector.extract_strided_slice %129 {offsets = [0, 0], sizes = [8, 96], strides = [1, 1]} : vector<8x128xf32> to vector<8x96xf32>
    %131 = arith.negf %130 : vector<8x96xf32>
    %132 = math.exp %131 : vector<8x96xf32>
    %cst_34 = arith.constant 1.000000e+00 : f32
    %133 = vector.broadcast %cst_34 : f32 to vector<8x96xf32>
    %134 = arith.addf %133, %132 : vector<8x96xf32>
    %135 = arith.divf %133, %134 : vector<8x96xf32>
    %136 = vector.extract_strided_slice %135 {offsets = [0, 0], sizes = [8, 32], strides = [1, 1]} : vector<8x96xf32> to vector<8x32xf32>
    %137 = vector.extract_strided_slice %135 {offsets = [0, 32], sizes = [8, 32], strides = [1, 1]} : vector<8x96xf32> to vector<8x32xf32>
    %138 = vector.extract_strided_slice %135 {offsets = [0, 64], sizes = [8, 32], strides = [1, 1]} : vector<8x96xf32> to vector<8x32xf32>
    %139 = vector.extract_strided_slice %129 {offsets = [0, 96], sizes = [8, 32], strides = [1, 1]} : vector<8x128xf32> to vector<8x32xf32>
    %140 = math.tanh %139 : vector<8x32xf32>
    %141 = arith.mulf %137, %104 : vector<8x32xf32>
    %142 = arith.mulf %136, %140 : vector<8x32xf32>
    %143 = arith.addf %141, %142 : vector<8x32xf32>
    %144 = math.tanh %143 : vector<8x32xf32>
    %145 = arith.mulf %138, %144 : vector<8x32xf32>
    %146 = vector.extract_strided_slice %12 {offsets = [3, 0, 0], sizes = [1, 8, 128], strides = [1, 1, 1]} : vector<8x8x128xf32> to vector<1x8x128xf32>
    %147 = vector.shape_cast %146 : vector<1x8x128xf32> to vector<8x128xf32>
    %cst_35 = arith.constant dense<0.000000e+00> : vector<8x128xf32>
    %148 = tpu.matmul %126, %0, %cst_35 {dimension_numbers = #tpu.dot_dimension_numbers<[1], [0], [0], [1], [0, 0, 1, 1], [], []>} : vector<8x32xf32>, vector<32x128xf32>, vector<8x128xf32> -> vector<8x128xf32>
    %149 = arith.addf %147, %148 : vector<8x128xf32>
    %150 = vector.extract_strided_slice %149 {offsets = [0, 0], sizes = [8, 96], strides = [1, 1]} : vector<8x128xf32> to vector<8x96xf32>
    %151 = arith.negf %150 : vector<8x96xf32>
    %152 = math.exp %151 : vector<8x96xf32>
    %cst_36 = arith.constant 1.000000e+00 : f32
    %153 = vector.broadcast %cst_36 : f32 to vector<8x96xf32>
    %154 = arith.addf %153, %152 : vector<8x96xf32>
    %155 = arith.divf %153, %154 : vector<8x96xf32>
    %156 = vector.extract_strided_slice %155 {offsets = [0, 0], sizes = [8, 32], strides = [1, 1]} : vector<8x96xf32> to vector<8x32xf32>
    %157 = vector.extract_strided_slice %155 {offsets = [0, 32], sizes = [8, 32], strides = [1, 1]} : vector<8x96xf32> to vector<8x32xf32>
    %158 = vector.extract_strided_slice %155 {offsets = [0, 64], sizes = [8, 32], strides = [1, 1]} : vector<8x96xf32> to vector<8x32xf32>
    %159 = vector.extract_strided_slice %149 {offsets = [0, 96], sizes = [8, 32], strides = [1, 1]} : vector<8x128xf32> to vector<8x32xf32>
    %160 = math.tanh %159 : vector<8x32xf32>
    %161 = arith.mulf %157, %124 : vector<8x32xf32>
    %162 = arith.mulf %156, %160 : vector<8x32xf32>
    %163 = arith.addf %161, %162 : vector<8x32xf32>
    %164 = math.tanh %163 : vector<8x32xf32>
    %165 = arith.mulf %158, %164 : vector<8x32xf32>
    %166 = tpu.concatenate %165, %145 in 1 : vector<8x32xf32>, vector<8x32xf32> -> vector<8x64xf32>
    %cst_37 = arith.constant dense<0.000000e+00> : vector<8x128xf32>
    %167 = tpu.matmul %166, %1, %cst_37 {dimension_numbers = #tpu.dot_dimension_numbers<[1], [0], [0], [1], [0, 0, 1, 1], [], []>} : vector<8x64xf32>, vector<64x128xf32>, vector<8x128xf32> -> vector<8x128xf32>
    %168 = arith.addf %167, %4 : vector<8x128xf32>
    %169 = vector.extract_strided_slice %168 {offsets = [0, 0], sizes = [8, 96], strides = [1, 1]} : vector<8x128xf32> to vector<8x96xf32>
    %170 = arith.negf %169 : vector<8x96xf32>
    %171 = math.exp %170 : vector<8x96xf32>
    %cst_38 = arith.constant 1.000000e+00 : f32
    %172 = vector.broadcast %cst_38 : f32 to vector<8x96xf32>
    %173 = arith.addf %172, %171 : vector<8x96xf32>
    %174 = arith.divf %172, %173 : vector<8x96xf32>
    %175 = vector.extract_strided_slice %174 {offsets = [0, 0], sizes = [8, 32], strides = [1, 1]} : vector<8x96xf32> to vector<8x32xf32>
    %176 = vector.extract_strided_slice %174 {offsets = [0, 32], sizes = [8, 32], strides = [1, 1]} : vector<8x96xf32> to vector<8x32xf32>
    %177 = vector.extract_strided_slice %174 {offsets = [0, 64], sizes = [8, 32], strides = [1, 1]} : vector<8x96xf32> to vector<8x32xf32>
    %178 = vector.extract_strided_slice %168 {offsets = [0, 96], sizes = [8, 32], strides = [1, 1]} : vector<8x128xf32> to vector<8x32xf32>
    %179 = math.tanh %178 : vector<8x32xf32>
    %180 = arith.mulf %176, %143 : vector<8x32xf32>
    %181 = arith.mulf %175, %179 : vector<8x32xf32>
    %182 = arith.addf %180, %181 : vector<8x32xf32>
    %183 = math.tanh %182 : vector<8x32xf32>
    %184 = arith.mulf %177, %183 : vector<8x32xf32>
    %185 = vector.extract_strided_slice %12 {offsets = [4, 0, 0], sizes = [1, 8, 128], strides = [1, 1, 1]} : vector<8x8x128xf32> to vector<1x8x128xf32>
    %186 = vector.shape_cast %185 : vector<1x8x128xf32> to vector<8x128xf32>
    %cst_39 = arith.constant dense<0.000000e+00> : vector<8x128xf32>
    %187 = tpu.matmul %165, %0, %cst_39 {dimension_numbers = #tpu.dot_dimension_numbers<[1], [0], [0], [1], [0, 0, 1, 1], [], []>} : vector<8x32xf32>, vector<32x128xf32>, vector<8x128xf32> -> vector<8x128xf32>
    %188 = arith.addf %186, %187 : vector<8x128xf32>
    %189 = vector.extract_strided_slice %188 {offsets = [0, 0], sizes = [8, 96], strides = [1, 1]} : vector<8x128xf32> to vector<8x96xf32>
    %190 = arith.negf %189 : vector<8x96xf32>
    %191 = math.exp %190 : vector<8x96xf32>
    %cst_40 = arith.constant 1.000000e+00 : f32
    %192 = vector.broadcast %cst_40 : f32 to vector<8x96xf32>
    %193 = arith.addf %192, %191 : vector<8x96xf32>
    %194 = arith.divf %192, %193 : vector<8x96xf32>
    %195 = vector.extract_strided_slice %194 {offsets = [0, 0], sizes = [8, 32], strides = [1, 1]} : vector<8x96xf32> to vector<8x32xf32>
    %196 = vector.extract_strided_slice %194 {offsets = [0, 32], sizes = [8, 32], strides = [1, 1]} : vector<8x96xf32> to vector<8x32xf32>
    %197 = vector.extract_strided_slice %194 {offsets = [0, 64], sizes = [8, 32], strides = [1, 1]} : vector<8x96xf32> to vector<8x32xf32>
    %198 = vector.extract_strided_slice %188 {offsets = [0, 96], sizes = [8, 32], strides = [1, 1]} : vector<8x128xf32> to vector<8x32xf32>
    %199 = math.tanh %198 : vector<8x32xf32>
    %200 = arith.mulf %196, %163 : vector<8x32xf32>
    %201 = arith.mulf %195, %199 : vector<8x32xf32>
    %202 = arith.addf %200, %201 : vector<8x32xf32>
    %203 = math.tanh %202 : vector<8x32xf32>
    %204 = arith.mulf %197, %203 : vector<8x32xf32>
    %205 = tpu.concatenate %204, %184 in 1 : vector<8x32xf32>, vector<8x32xf32> -> vector<8x64xf32>
    %cst_41 = arith.constant dense<0.000000e+00> : vector<8x128xf32>
    %206 = tpu.matmul %205, %1, %cst_41 {dimension_numbers = #tpu.dot_dimension_numbers<[1], [0], [0], [1], [0, 0, 1, 1], [], []>} : vector<8x64xf32>, vector<64x128xf32>, vector<8x128xf32> -> vector<8x128xf32>
    %207 = arith.addf %206, %4 : vector<8x128xf32>
    %208 = vector.extract_strided_slice %207 {offsets = [0, 0], sizes = [8, 96], strides = [1, 1]} : vector<8x128xf32> to vector<8x96xf32>
    %209 = arith.negf %208 : vector<8x96xf32>
    %210 = math.exp %209 : vector<8x96xf32>
    %cst_42 = arith.constant 1.000000e+00 : f32
    %211 = vector.broadcast %cst_42 : f32 to vector<8x96xf32>
    %212 = arith.addf %211, %210 : vector<8x96xf32>
    %213 = arith.divf %211, %212 : vector<8x96xf32>
    %214 = vector.extract_strided_slice %213 {offsets = [0, 0], sizes = [8, 32], strides = [1, 1]} : vector<8x96xf32> to vector<8x32xf32>
    %215 = vector.extract_strided_slice %213 {offsets = [0, 32], sizes = [8, 32], strides = [1, 1]} : vector<8x96xf32> to vector<8x32xf32>
    %216 = vector.extract_strided_slice %213 {offsets = [0, 64], sizes = [8, 32], strides = [1, 1]} : vector<8x96xf32> to vector<8x32xf32>
    %217 = vector.extract_strided_slice %207 {offsets = [0, 96], sizes = [8, 32], strides = [1, 1]} : vector<8x128xf32> to vector<8x32xf32>
    %218 = math.tanh %217 : vector<8x32xf32>
    %219 = arith.mulf %215, %182 : vector<8x32xf32>
    %220 = arith.mulf %214, %218 : vector<8x32xf32>
    %221 = arith.addf %219, %220 : vector<8x32xf32>
    %222 = math.tanh %221 : vector<8x32xf32>
    %223 = arith.mulf %216, %222 : vector<8x32xf32>
    %224 = vector.extract_strided_slice %12 {offsets = [5, 0, 0], sizes = [1, 8, 128], strides = [1, 1, 1]} : vector<8x8x128xf32> to vector<1x8x128xf32>
    %225 = vector.shape_cast %224 : vector<1x8x128xf32> to vector<8x128xf32>
    %cst_43 = arith.constant dense<0.000000e+00> : vector<8x128xf32>
    %226 = tpu.matmul %204, %0, %cst_43 {dimension_numbers = #tpu.dot_dimension_numbers<[1], [0], [0], [1], [0, 0, 1, 1], [], []>} : vector<8x32xf32>, vector<32x128xf32>, vector<8x128xf32> -> vector<8x128xf32>
    %227 = arith.addf %225, %226 : vector<8x128xf32>
    %228 = vector.extract_strided_slice %227 {offsets = [0, 0], sizes = [8, 96], strides = [1, 1]} : vector<8x128xf32> to vector<8x96xf32>
    %229 = arith.negf %228 : vector<8x96xf32>
    %230 = math.exp %229 : vector<8x96xf32>
    %cst_44 = arith.constant 1.000000e+00 : f32
    %231 = vector.broadcast %cst_44 : f32 to vector<8x96xf32>
    %232 = arith.addf %231, %230 : vector<8x96xf32>
    %233 = arith.divf %231, %232 : vector<8x96xf32>
    %234 = vector.extract_strided_slice %233 {offsets = [0, 0], sizes = [8, 32], strides = [1, 1]} : vector<8x96xf32> to vector<8x32xf32>
    %235 = vector.extract_strided_slice %233 {offsets = [0, 32], sizes = [8, 32], strides = [1, 1]} : vector<8x96xf32> to vector<8x32xf32>
    %236 = vector.extract_strided_slice %233 {offsets = [0, 64], sizes = [8, 32], strides = [1, 1]} : vector<8x96xf32> to vector<8x32xf32>
    %237 = vector.extract_strided_slice %227 {offsets = [0, 96], sizes = [8, 32], strides = [1, 1]} : vector<8x128xf32> to vector<8x32xf32>
    %238 = math.tanh %237 : vector<8x32xf32>
    %239 = arith.mulf %235, %202 : vector<8x32xf32>
    %240 = arith.mulf %234, %238 : vector<8x32xf32>
    %241 = arith.addf %239, %240 : vector<8x32xf32>
    %242 = math.tanh %241 : vector<8x32xf32>
    %243 = arith.mulf %236, %242 : vector<8x32xf32>
    %244 = tpu.concatenate %243, %223 in 1 : vector<8x32xf32>, vector<8x32xf32> -> vector<8x64xf32>
    %cst_45 = arith.constant dense<0.000000e+00> : vector<8x128xf32>
    %245 = tpu.matmul %244, %1, %cst_45 {dimension_numbers = #tpu.dot_dimension_numbers<[1], [0], [0], [1], [0, 0, 1, 1], [], []>} : vector<8x64xf32>, vector<64x128xf32>, vector<8x128xf32> -> vector<8x128xf32>
    %246 = arith.addf %245, %4 : vector<8x128xf32>
    %247 = vector.extract_strided_slice %246 {offsets = [0, 0], sizes = [8, 96], strides = [1, 1]} : vector<8x128xf32> to vector<8x96xf32>
    %248 = arith.negf %247 : vector<8x96xf32>
    %249 = math.exp %248 : vector<8x96xf32>
    %cst_46 = arith.constant 1.000000e+00 : f32
    %250 = vector.broadcast %cst_46 : f32 to vector<8x96xf32>
    %251 = arith.addf %250, %249 : vector<8x96xf32>
    %252 = arith.divf %250, %251 : vector<8x96xf32>
    %253 = vector.extract_strided_slice %252 {offsets = [0, 0], sizes = [8, 32], strides = [1, 1]} : vector<8x96xf32> to vector<8x32xf32>
    %254 = vector.extract_strided_slice %252 {offsets = [0, 32], sizes = [8, 32], strides = [1, 1]} : vector<8x96xf32> to vector<8x32xf32>
    %255 = vector.extract_strided_slice %252 {offsets = [0, 64], sizes = [8, 32], strides = [1, 1]} : vector<8x96xf32> to vector<8x32xf32>
    %256 = vector.extract_strided_slice %246 {offsets = [0, 96], sizes = [8, 32], strides = [1, 1]} : vector<8x128xf32> to vector<8x32xf32>
    %257 = math.tanh %256 : vector<8x32xf32>
    %258 = arith.mulf %254, %221 : vector<8x32xf32>
    %259 = arith.mulf %253, %257 : vector<8x32xf32>
    %260 = arith.addf %258, %259 : vector<8x32xf32>
    %261 = math.tanh %260 : vector<8x32xf32>
    %262 = arith.mulf %255, %261 : vector<8x32xf32>
    %263 = vector.extract_strided_slice %12 {offsets = [6, 0, 0], sizes = [1, 8, 128], strides = [1, 1, 1]} : vector<8x8x128xf32> to vector<1x8x128xf32>
    %264 = vector.shape_cast %263 : vector<1x8x128xf32> to vector<8x128xf32>
    %cst_47 = arith.constant dense<0.000000e+00> : vector<8x128xf32>
    %265 = tpu.matmul %243, %0, %cst_47 {dimension_numbers = #tpu.dot_dimension_numbers<[1], [0], [0], [1], [0, 0, 1, 1], [], []>} : vector<8x32xf32>, vector<32x128xf32>, vector<8x128xf32> -> vector<8x128xf32>
    %266 = arith.addf %264, %265 : vector<8x128xf32>
    %267 = vector.extract_strided_slice %266 {offsets = [0, 0], sizes = [8, 96], strides = [1, 1]} : vector<8x128xf32> to vector<8x96xf32>
    %268 = arith.negf %267 : vector<8x96xf32>
    %269 = math.exp %268 : vector<8x96xf32>
    %cst_48 = arith.constant 1.000000e+00 : f32
    %270 = vector.broadcast %cst_48 : f32 to vector<8x96xf32>
    %271 = arith.addf %270, %269 : vector<8x96xf32>
    %272 = arith.divf %270, %271 : vector<8x96xf32>
    %273 = vector.extract_strided_slice %272 {offsets = [0, 0], sizes = [8, 32], strides = [1, 1]} : vector<8x96xf32> to vector<8x32xf32>
    %274 = vector.extract_strided_slice %272 {offsets = [0, 32], sizes = [8, 32], strides = [1, 1]} : vector<8x96xf32> to vector<8x32xf32>
    %275 = vector.extract_strided_slice %272 {offsets = [0, 64], sizes = [8, 32], strides = [1, 1]} : vector<8x96xf32> to vector<8x32xf32>
    %276 = vector.extract_strided_slice %266 {offsets = [0, 96], sizes = [8, 32], strides = [1, 1]} : vector<8x128xf32> to vector<8x32xf32>
    %277 = math.tanh %276 : vector<8x32xf32>
    %278 = arith.mulf %274, %241 : vector<8x32xf32>
    %279 = arith.mulf %273, %277 : vector<8x32xf32>
    %280 = arith.addf %278, %279 : vector<8x32xf32>
    %281 = math.tanh %280 : vector<8x32xf32>
    %282 = arith.mulf %275, %281 : vector<8x32xf32>
    %283 = tpu.concatenate %282, %262 in 1 : vector<8x32xf32>, vector<8x32xf32> -> vector<8x64xf32>
    %cst_49 = arith.constant dense<0.000000e+00> : vector<8x128xf32>
    %284 = tpu.matmul %283, %1, %cst_49 {dimension_numbers = #tpu.dot_dimension_numbers<[1], [0], [0], [1], [0, 0, 1, 1], [], []>} : vector<8x64xf32>, vector<64x128xf32>, vector<8x128xf32> -> vector<8x128xf32>
    %285 = arith.addf %284, %4 : vector<8x128xf32>
    %286 = vector.extract_strided_slice %285 {offsets = [0, 0], sizes = [8, 96], strides = [1, 1]} : vector<8x128xf32> to vector<8x96xf32>
    %287 = arith.negf %286 : vector<8x96xf32>
    %288 = math.exp %287 : vector<8x96xf32>
    %cst_50 = arith.constant 1.000000e+00 : f32
    %289 = vector.broadcast %cst_50 : f32 to vector<8x96xf32>
    %290 = arith.addf %289, %288 : vector<8x96xf32>
    %291 = arith.divf %289, %290 : vector<8x96xf32>
    %292 = vector.extract_strided_slice %291 {offsets = [0, 0], sizes = [8, 32], strides = [1, 1]} : vector<8x96xf32> to vector<8x32xf32>
    %293 = vector.extract_strided_slice %291 {offsets = [0, 32], sizes = [8, 32], strides = [1, 1]} : vector<8x96xf32> to vector<8x32xf32>
    %294 = vector.extract_strided_slice %291 {offsets = [0, 64], sizes = [8, 32], strides = [1, 1]} : vector<8x96xf32> to vector<8x32xf32>
    %295 = vector.extract_strided_slice %285 {offsets = [0, 96], sizes = [8, 32], strides = [1, 1]} : vector<8x128xf32> to vector<8x32xf32>
    %296 = math.tanh %295 : vector<8x32xf32>
    %297 = arith.mulf %293, %260 : vector<8x32xf32>
    %298 = arith.mulf %292, %296 : vector<8x32xf32>
    %299 = arith.addf %297, %298 : vector<8x32xf32>
    %300 = math.tanh %299 : vector<8x32xf32>
    %301 = arith.mulf %294, %300 : vector<8x32xf32>
    %302 = vector.extract_strided_slice %12 {offsets = [7, 0, 0], sizes = [1, 8, 128], strides = [1, 1, 1]} : vector<8x8x128xf32> to vector<1x8x128xf32>
    %303 = vector.shape_cast %302 : vector<1x8x128xf32> to vector<8x128xf32>
    %cst_51 = arith.constant dense<0.000000e+00> : vector<8x128xf32>
    %304 = tpu.matmul %282, %0, %cst_51 {dimension_numbers = #tpu.dot_dimension_numbers<[1], [0], [0], [1], [0, 0, 1, 1], [], []>} : vector<8x32xf32>, vector<32x128xf32>, vector<8x128xf32> -> vector<8x128xf32>
    %305 = arith.addf %303, %304 : vector<8x128xf32>
    %306 = vector.extract_strided_slice %305 {offsets = [0, 0], sizes = [8, 96], strides = [1, 1]} : vector<8x128xf32> to vector<8x96xf32>
    %307 = arith.negf %306 : vector<8x96xf32>
    %308 = math.exp %307 : vector<8x96xf32>
    %cst_52 = arith.constant 1.000000e+00 : f32
    %309 = vector.broadcast %cst_52 : f32 to vector<8x96xf32>
    %310 = arith.addf %309, %308 : vector<8x96xf32>
    %311 = arith.divf %309, %310 : vector<8x96xf32>
    %312 = vector.extract_strided_slice %311 {offsets = [0, 0], sizes = [8, 32], strides = [1, 1]} : vector<8x96xf32> to vector<8x32xf32>
    %313 = vector.extract_strided_slice %311 {offsets = [0, 32], sizes = [8, 32], strides = [1, 1]} : vector<8x96xf32> to vector<8x32xf32>
    %314 = vector.extract_strided_slice %311 {offsets = [0, 64], sizes = [8, 32], strides = [1, 1]} : vector<8x96xf32> to vector<8x32xf32>
    %315 = vector.extract_strided_slice %305 {offsets = [0, 96], sizes = [8, 32], strides = [1, 1]} : vector<8x128xf32> to vector<8x32xf32>
    %316 = math.tanh %315 : vector<8x32xf32>
    %317 = arith.mulf %313, %280 : vector<8x32xf32>
    %318 = arith.mulf %312, %316 : vector<8x32xf32>
    %319 = arith.addf %317, %318 : vector<8x32xf32>
    %320 = math.tanh %319 : vector<8x32xf32>
    %321 = arith.mulf %314, %320 : vector<8x32xf32>
    %322 = tpu.concatenate %321, %301 in 1 : vector<8x32xf32>, vector<8x32xf32> -> vector<8x64xf32>
    %cst_53 = arith.constant dense<0.000000e+00> : vector<8x128xf32>
    %323 = tpu.matmul %322, %1, %cst_53 {dimension_numbers = #tpu.dot_dimension_numbers<[1], [0], [0], [1], [0, 0, 1, 1], [], []>} : vector<8x64xf32>, vector<64x128xf32>, vector<8x128xf32> -> vector<8x128xf32>
    %324 = arith.addf %323, %4 : vector<8x128xf32>
    %325 = vector.extract_strided_slice %324 {offsets = [0, 0], sizes = [8, 96], strides = [1, 1]} : vector<8x128xf32> to vector<8x96xf32>
    %326 = arith.negf %325 : vector<8x96xf32>
    %327 = math.exp %326 : vector<8x96xf32>
    %cst_54 = arith.constant 1.000000e+00 : f32
    %328 = vector.broadcast %cst_54 : f32 to vector<8x96xf32>
    %329 = arith.addf %328, %327 : vector<8x96xf32>
    %330 = arith.divf %328, %329 : vector<8x96xf32>
    %331 = vector.extract_strided_slice %330 {offsets = [0, 0], sizes = [8, 32], strides = [1, 1]} : vector<8x96xf32> to vector<8x32xf32>
    %332 = vector.extract_strided_slice %330 {offsets = [0, 32], sizes = [8, 32], strides = [1, 1]} : vector<8x96xf32> to vector<8x32xf32>
    %333 = vector.extract_strided_slice %330 {offsets = [0, 64], sizes = [8, 32], strides = [1, 1]} : vector<8x96xf32> to vector<8x32xf32>
    %334 = vector.extract_strided_slice %324 {offsets = [0, 96], sizes = [8, 32], strides = [1, 1]} : vector<8x128xf32> to vector<8x32xf32>
    %335 = math.tanh %334 : vector<8x32xf32>
    %336 = arith.mulf %332, %299 : vector<8x32xf32>
    %337 = arith.mulf %331, %335 : vector<8x32xf32>
    %338 = arith.addf %336, %337 : vector<8x32xf32>
    %339 = math.tanh %338 : vector<8x32xf32>
    %340 = arith.mulf %333, %339 : vector<8x32xf32>
    %c0_55 = arith.constant 0 : index
    %c0_56 = arith.constant 0 : index
    %341 = vector.load %arg8[%c0_55, %c0_56] : memref<32x8xf32, #tpu.memory_space<vmem>>, vector<32x8xf32>
    %cst_57 = arith.constant dense<0.000000e+00> : vector<8x8xf32>
    %342 = tpu.matmul %340, %341, %cst_57 {dimension_numbers = #tpu.dot_dimension_numbers<[1], [0], [0], [1], [0, 0, 1, 1], [], []>} : vector<8x32xf32>, vector<32x8xf32>, vector<8x8xf32> -> vector<8x8xf32>
    %c0_58 = arith.constant 0 : index
    %c0_59 = arith.constant 0 : index
    %343 = vector.load %arg9[%c0_58, %c0_59] : memref<1x8xf32, #tpu.memory_space<vmem>>, vector<1x8xf32>
    %344 = vector.broadcast %343 : vector<1x8xf32> to vector<8x8xf32>
    %345 = arith.addf %342, %344 : vector<8x8xf32>
    %c0_60 = arith.constant 0 : index
    %c0_61 = arith.constant 0 : index
    %346 = vector.load %arg10[%c0_60, %c0_61] : memref<8x8xf32, #tpu.memory_space<vmem>>, vector<8x8xf32>
    tpu.vector_store %arg10[%c0_60, %c0_61], %345 {strides = array<i32>} : memref<8x8xf32, #tpu.memory_space<vmem>>, vector<8x8xf32>,
    return
  }
}

</mosaic_0001>

<llo_original>
// kernel: _forward_impl.1
$region0: #{_forward_impl.1}
  #allocation0 [shape = 'u32[]', space=smem, size = 0x4, offset = 0x4, fixed_abs, tag = 'smem constant byte address 0x4 - core index']
  #allocation1 [shape = 'u32[144,128]{1,0:T(1,128)}', space=vmem, size = 0x12000, scoped, tag = 'internal scratch']
  %s0 = inlined_call_operand.vmem [shape: f32[8,8,16], index: 0, kind: input, shape index: {}]
  %s1 = inlined_call_operand.vmem [shape: f32[2,1,32], index: 1, kind: input, shape index: {}]
  %s2 = inlined_call_operand.vmem [shape: f32[2,1,32], index: 2, kind: input, shape index: {}]
  %s3 = inlined_call_operand.vmem [shape: f32[16,128], index: 3, kind: input, shape index: {}]
  %s4 = inlined_call_operand.hbm [shape: f32[32,128], index: 4, kind: input, shape index: {}]
  %s5 = inlined_call_operand.vmem [shape: f32[1,128], index: 5, kind: input, shape index: {}]
  %s6 = inlined_call_operand.vmem [shape: f32[64,128], index: 6, kind: input, shape index: {}]
  %s7 = inlined_call_operand.vmem [shape: f32[1,128], index: 7, kind: input, shape index: {}]
  %s8 = inlined_call_operand.vmem [shape: f32[32,8], index: 8, kind: input, shape index: {}]
  %s9 = inlined_call_operand.vmem [shape: f32[1,8], index: 9, kind: input, shape index: {}]
  %s10 = inlined_call_operand.vmem [shape: f32[8,8], index: 10, kind: output, shape index: {}]
  %s11 = sld [smem:[#allocation0]]
  $region54: #{_forward_impl.1} parent=0
    _
  %s13 = ssub.s32 1, %s11
  %s14 = scalar_select 0, %s13, %s11
  $region1: #{_forward_impl.1} parent=0
    #allocation2 [shape = 'u8[16384]{0}', space=vmem, size = 0x4000, scoped, tag = 'input window, operand 4, single buffered']
    #allocation3 [shape = 's32[1]{0}', space=sflag, size = 0x4, scoped, tag = 'scoped memory for _forward_impl.1']
    %15 = vsyncpa [#allocation3], 0
    // Predicated region
    $region2: #{_forward_impl.1} parent=1 // pred_check
      _
    $region3: #{_forward_impl.1} parent=1 // pred_check_branch
      %17 = sbr.rel (0) target = $region5
    $region4: #{_forward_impl.1} parent=1 // pred_region
      _
    $region5: #{_forward_impl.1} parent=1 // pred_fallthru
      _
    // Predicated region
    $region6: #{_forward_impl.1} parent=1 // pred_check
      _
    $region7: #{_forward_impl.1} parent=1 // pred_check_branch
      %19 = sbr.rel (0) target = $region9
    $region8: #{_forward_impl.1} parent=1 // pred_region
      _
    $region9: #{_forward_impl.1} parent=1 // pred_fallthru
      _
    // Predicated region
    $region10: #{_forward_impl.1} parent=1 // pred_check
      _
    $region11: #{_forward_impl.1} parent=1 // pred_check_branch
      %21 = sbr.rel (0) target = $region13
    $region12: #{_forward_impl.1} parent=1 // pred_region
      _
    $region13: #{_forward_impl.1} parent=1 // pred_fallthru
      _
    // Predicated region
    $region14: #{_forward_impl.1} parent=1 // pred_check
      _
    $region15: #{_forward_impl.1} parent=1 // pred_check_branch
      %23 = sbr.rel (0) target = $region17
    $region16: #{_forward_impl.1} parent=1 // pred_region
      _
    $region17: #{_forward_impl.1} parent=1 // pred_fallthru
      _
    // Predicated region
    $region18: #{_forward_impl.1} parent=1 // pred_check
      _
    $region19: #{_forward_impl.1} parent=1 // pred_check_branch
      %25 = sbr.rel (0) target = $region21
    $region20: #{_forward_impl.1} parent=1 // pred_region
      %s27 = ssub.s32 512, 512
      %28 = vsyncadd [#allocation3], %s27
      %s29 = sshll.u32 [#allocation2], 4
      %s30 = int_to_ptr.vmem [resolvable:$true] %s29
      %35 = dma.hbm_to_vmem [thread:$0]  %s4, 512, %s30, [#allocation3], 128, 128, 8
    $region21: #{_forward_impl.1} parent=1 // pred_fallthru
      _
    // Predicated region
    $region22: #{_forward_impl.1} parent=1 // pred_check
      _
    $region23: #{_forward_impl.1} parent=1 // pred_check_branch
      %37 = sbr.rel (0) target = $region25
    $region24: #{_forward_impl.1} parent=1 // pred_region
      _
    $region25: #{_forward_impl.1} parent=1 // pred_fallthru
      _
    // Predicated region
    $region26: #{_forward_impl.1} parent=1 // pred_check
      _
    $region27: #{_forward_impl.1} parent=1 // pred_check_branch
      %39 = sbr.rel (0) target = $region29
    $region28: #{_forward_impl.1} parent=1 // pred_region
      _
    $region29: #{_forward_impl.1} parent=1 // pred_fallthru
      _
    // Predicated region
    $region30: #{_forward_impl.1} parent=1 // pred_check
      _
    $region31: #{_forward_impl.1} parent=1 // pred_check_branch
      %41 = sbr.rel (0) target = $region33
    $region32: #{_forward_impl.1} parent=1 // pred_region
      _
    $region33: #{_forward_impl.1} parent=1 // pred_fallthru
      _
    // Predicated region
    $region34: #{_forward_impl.1} parent=1 // pred_check
      _
    $region35: #{_forward_impl.1} parent=1 // pred_check_branch
      %43 = sbr.rel (0) target = $region37
    $region36: #{_forward_impl.1} parent=1 // pred_region
      _
    $region37: #{_forward_impl.1} parent=1 // pred_fallthru
      _
    // Predicated region
    $region38: #{_forward_impl.1} parent=1 // pred_check
      _
    $region39: #{_forward_impl.1} parent=1 // pred_check_branch
      %45 = sbr.rel (0) target = $region41
    $region40: #{_forward_impl.1} parent=1 // pred_region
      _
    $region41: #{_forward_impl.1} parent=1 // pred_fallthru
      _
    // Predicated region
    $region42: #{_forward_impl.1} parent=1 // pred_check
      _
    $region43: #{_forward_impl.1} parent=1 // pred_check_branch
      %47 = sbr.rel (0) target = $region45
    $region44: #{_forward_impl.1} parent=1 // pred_region
      %48 = dma.done [#allocation3], 512
    $region45: #{_forward_impl.1} parent=1 // pred_fallthru
      _
    %v49 = vld [vmem:[#allocation2] sm:$0xff]
    %v50 = vld [vmem:[#allocation2 + $0x8] sm:$0xff]
    %v51 = vld [vmem:[#allocation2 + $0x10] sm:$0xff]
    %v52 = vld [vmem:[#allocation2 + $0x18] sm:$0xff]
    %v53 = vld [vmem:[%s6] sm:$0xff]
    %v54 = vld [vmem:[%s6 + $0x8] sm:$0xff]
    %v55 = vld [vmem:[%s6 + $0x10] sm:$0xff]
    %v56 = vld [vmem:[%s6 + $0x18] sm:$0xff]
    %v57 = vld [vmem:[%s6 + $0x20] sm:$0xff]
    %v58 = vld [vmem:[%s6 + $0x28] sm:$0xff]
    %v59 = vld [vmem:[%s6 + $0x30] sm:$0xff]
    %v60 = vld [vmem:[%s6 + $0x38] sm:$0xff]
    %v61 = vld [vmem:[%s7] sm:$0x1]
    %v63 = vlaneseq
    %v64 = vshrl.u32 %v63, 7
    %v65 = vsub.s32 0, %v64
    %v66 = vrot.slane %v61, %v65
    %v68 = vld [vmem:[%s0] sm:$0xff]
    %v69 = vld [vmem:[%s0 + $0x8] sm:$0xff]
    %v70 = vld [vmem:[%s0 + $0x10] sm:$0xff]
    %v71 = vld [vmem:[%s0 + $0x18] sm:$0xff]
    %v72 = vld [vmem:[%s0 + $0x20] sm:$0xff]
    %v73 = vld [vmem:[%s0 + $0x28] sm:$0xff]
    %v74 = vld [vmem:[%s0 + $0x30] sm:$0xff]
    %v75 = vld [vmem:[%s0 + $0x38] sm:$0xff]
    %v76 = vld [vmem:[%s3] sm:$0xff]
    %v77 = vld [vmem:[%s3 + $0x8] sm:$0xff]
    %v78 = vld [vmem:[%s5] sm:$0x1]
    %v80 = vlaneseq
    %v81 = vshrl.u32 %v80, 7
    %v82 = vsub.s32 0, %v81
    %v83 = vrot.slane %v78, %v82
    %vm85 = vcmask 130048
    %v87 = vsel %vm85, %v68, 0
    %v90 = vsel %vm85, %v69, 0
    %v93 = vsel %vm85, %v70, 0
    %v96 = vsel %vm85, %v71, 0
    %v99 = vsel %vm85, %v72, 0
    %v102 = vsel %vm85, %v73, 0
    %v105 = vsel %vm85, %v74, 0
    %v108 = vsel %vm85, %v75, 0
    %110 = vmatprep.subr.mxu0 0.0
    %111 = vmatpush1.msra.mxu0 %v76
    %112 = vmatprep.subr.mxu0 0.0
    %113 = vmatpush1.msra.mxu0 %v77
    %114 = vmatprep.subr.mxu0 0.0
    %115 = vmatpush1.msra.mxu0 0.0
    %116 = vmatprep.subr.mxu0 0.0
    %117 = vmatpush1.msra.mxu0 0.0
    %118 = vmatprep.subr.mxu0 0.0
    %119 = vmatpush1.msra.mxu0 0.0
    %120 = vmatprep.subr.mxu0 0.0
    %121 = vmatpush1.msra.mxu0 0.0
    %122 = vmatprep.subr.mxu0 0.0
    %123 = vmatpush1.msra.mxu0 0.0
    %124 = vmatprep.subr.mxu0 0.0
    %125 = vmatpush1.msra.mxu0 0.0
    %126 = vmatprep.subr.mxu0 0.0
    %127 = vmatpush1.msra.mxu0 0.0
    %128 = vmatprep.subr.mxu0 0.0
    %129 = vmatpush1.msra.mxu0 0.0
    %130 = vmatprep.subr.mxu0 0.0
    %131 = vmatpush1.msra.mxu0 0.0
    %132 = vmatprep.subr.mxu0 0.0
    %133 = vmatpush1.msra.mxu0 0.0
    %134 = vmatprep.subr.mxu0 0.0
    %135 = vmatpush1.msra.mxu0 0.0
    %136 = vmatprep.subr.mxu0 0.0
    %137 = vmatpush1.msra.mxu0 0.0
    %138 = vmatprep.subr.mxu0 0.0
    %139 = vmatpush1.msra.mxu0 0.0
    %140 = vmatprep.subr.mxu0 0.0
    %141 = vmatpush1.msra.mxu0 0.0
    %142 = vmatprep.subr.mxu0 0.0
    %143 = vmatpush1.msra.mxu0 0.0
    %144 = vmatprep.subr.mxu0 0.0
    %145 = vmatpush1.msra.mxu0 0.0
    %146 = vmatprep.subr.mxu0 0.0
    %147 = vmatpush1.msra.mxu0 0.0
    %148 = vmatprep.subr.mxu0 0.0
    %149 = vmatpush1.msra.mxu0 0.0
    %150 = vmatprep.subr.mxu0 0.0
    %151 = vmatpush1.msra.mxu0 0.0
    %152 = vmatprep.subr.mxu0 0.0
    %153 = vmatpush1.msra.mxu0 0.0
    %154 = vmatprep.subr.mxu0 0.0
    %155 = vmatpush1.msra.mxu0 0.0
    %156 = vmatprep.subr.mxu0 0.0
    %157 = vmatpush1.msra.mxu0 0.0
    %158 = vmatprep.subr.mxu0 0.0
    %159 = vmatpush1.msra.mxu0 0.0
    %160 = vmatprep.subr.mxu0 0.0
    %161 = vmatpush1.msra.mxu0 0.0
    %162 = vmatprep.subr.mxu0 0.0
    %163 = vmatpush1.msra.mxu0 0.0
    %164 = vmatprep.subr.mxu0 0.0
    %165 = vmatpush1.msra.mxu0 0.0
    %166 = vmatprep.subr.mxu0 0.0
    %167 = vmatpush1.msra.mxu0 0.0
    %168 = vmatprep.subr.mxu0 0.0
    %169 = vmatpush1.msra.mxu0 0.0
    %170 = vmatprep.subr.mxu0 0.0
    %171 = vmatpush1.msra.mxu0 0.0
    %172 = vmatprep.subr.mxu0 0.0
    %173 = vmatpush1.msra.mxu0 0.0
    %174 = vmatprep.mubr.f32.mxu0 0.0
    %175 = vmatmul.mubr.f32.gmra.mrb[0].mxu0 %v87
    %v176 = vpop.f32.mrb[0].mxu0
    %v177 = vadd.f32 %v83, %v176
    %v178 = vpop.f32.mrb[0].mxu0
    %179 = vmatprep.mubr.f32.mxu0 0.0
    %180 = vmatmul.mubr.f32.gmra.mrb[0].mxu0 %v90
    %v181 = vpop.f32.mrb[0].mxu0
    %v182 = vadd.f32 %v83, %v181
    %v183 = vpop.f32.mrb[0].mxu0
    %184 = vmatprep.mubr.f32.mxu0 0.0
    %185 = vmatmul.mubr.f32.gmra.mrb[0].mxu0 %v93
    %v186 = vpop.f32.mrb[0].mxu0
    %v187 = vadd.f32 %v83, %v186
    %v188 = vpop.f32.mrb[0].mxu0
    %189 = vmatprep.mubr.f32.mxu0 0.0
    %190 = vmatmul.mubr.f32.gmra.mrb[0].mxu0 %v96
    %v191 = vpop.f32.mrb[0].mxu0
    %v192 = vadd.f32 %v83, %v191
    %v193 = vpop.f32.mrb[0].mxu0
    %194 = vmatprep.mubr.f32.mxu0 0.0
    %195 = vmatmul.mubr.f32.gmra.mrb[0].mxu0 %v99
    %v196 = vpop.f32.mrb[0].mxu0
    %v197 = vadd.f32 %v83, %v196
    %v198 = vpop.f32.mrb[0].mxu0
    %199 = vmatprep.mubr.f32.mxu0 0.0
    %200 = vmatmul.mubr.f32.gmra.mrb[0].mxu0 %v102
    %v201 = vpop.f32.mrb[0].mxu0
    %v202 = vadd.f32 %v83, %v201
    %v203 = vpop.f32.mrb[0].mxu0
    %204 = vmatprep.mubr.f32.mxu0 0.0
    %205 = vmatmul.mubr.f32.gmra.mrb[0].mxu0 %v105
    %v206 = vpop.f32.mrb[0].mxu0
    %v207 = vadd.f32 %v83, %v206
    %v208 = vpop.f32.mrb[0].mxu0
    %209 = vmatprep.mubr.f32.mxu0 0.0
    %210 = vmatmul.mubr.f32.gmra.mrb[0].mxu0 %v108
    %v211 = vpop.f32.mrb[0].mxu0
    %v212 = vadd.f32 %v83, %v211
    %v213 = vpop.f32.mrb[0].mxu0
    %214 = vdwg.mxu0
    %v215 = vld [vmem:[%s1] sm:$0x1]
    %v217 = vlaneseq
    %v218 = vshrl.u32 %v217, 7
    %v219 = vsub.s32 0, %v218
    %v220 = vrot.slane %v215, %v219
    %s221 = scalar_lea.vmem %s1, 1
    %v222 = vld [vmem:[%s221] sm:$0x1]
    %v224 = vlaneseq
    %v225 = vshrl.u32 %v224, 7
    %v226 = vsub.s32 0, %v225
    %v227 = vrot.slane %v222, %v226
    %v228 = vld [vmem:[%s2] sm:$0x1]
    %v230 = vlaneseq
    %v231 = vshrl.u32 %v230, 7
    %v232 = vsub.s32 0, %v231
    %v233 = vrot.slane %v228, %v232
    %s234 = scalar_lea.vmem %s2, 1
    %v235 = vld [vmem:[%s234] sm:$0x1]
    %v237 = vlaneseq
    %v238 = vshrl.u32 %v237, 7
    %v239 = vsub.s32 0, %v238
    %v240 = vrot.slane %v235, %v239
    %vm241 = vcmask 261120
    %v242 = vsel %vm241, %v220, 0
    %244 = vmatprep.subr.mxu0 0.0
    %245 = vmatpush1.msra.mxu0 %v49
    %246 = vmatprep.subr.mxu0 0.0
    %247 = vmatpush1.msra.mxu0 %v50
    %248 = vmatprep.subr.mxu0 0.0
    %249 = vmatpush1.msra.mxu0 %v51
    %250 = vmatprep.subr.mxu0 0.0
    %251 = vmatpush1.msra.mxu0 %v52
    %252 = vmatprep.subr.mxu0 0.0
    %253 = vmatpush1.msra.mxu0 0.0
    %254 = vmatprep.subr.mxu0 0.0
    %255 = vmatpush1.msra.mxu0 0.0
    %256 = vmatprep.subr.mxu0 0.0
    %257 = vmatpush1.msra.mxu0 0.0
    %258 = vmatprep.subr.mxu0 0.0
    %259 = vmatpush1.msra.mxu0 0.0
    %260 = vmatprep.subr.mxu0 0.0
    %261 = vmatpush1.msra.mxu0 0.0
    %262 = vmatprep.subr.mxu0 0.0
    %263 = vmatpush1.msra.mxu0 0.0
    %264 = vmatprep.subr.mxu0 0.0
    %265 = vmatpush1.msra.mxu0 0.0
    %266 = vmatprep.subr.mxu0 0.0
    %267 = vmatpush1.msra.mxu0 0.0
    %268 = vmatprep.subr.mxu0 0.0
    %269 = vmatpush1.msra.mxu0 0.0
    %270 = vmatprep.subr.mxu0 0.0
    %271 = vmatpush1.msra.mxu0 0.0
    %272 = vmatprep.subr.mxu0 0.0
    %273 = vmatpush1.msra.mxu0 0.0
    %274 = vmatprep.subr.mxu0 0.0
    %275 = vmatpush1.msra.mxu0 0.0
    %276 = vmatprep.subr.mxu0 0.0
    %277 = vmatpush1.msra.mxu0 0.0
    %278 = vmatprep.subr.mxu0 0.0
    %279 = vmatpush1.msra.mxu0 0.0
    %280 = vmatprep.subr.mxu0 0.0
    %281 = vmatpush1.msra.mxu0 0.0
    %282 = vmatprep.subr.mxu0 0.0
    %283 = vmatpush1.msra.mxu0 0.0
    %284 = vmatprep.subr.mxu0 0.0
    %285 = vmatpush1.msra.mxu0 0.0
    %286 = vmatprep.subr.mxu0 0.0
    %287 = vmatpush1.msra.mxu0 0.0
    %288 = vmatprep.subr.mxu0 0.0
    %289 = vmatpush1.msra.mxu0 0.0
    %290 = vmatprep.subr.mxu0 0.0
    %291 = vmatpush1.msra.mxu0 0.0
    %292 = vmatprep.subr.mxu0 0.0
    %293 = vmatpush1.msra.mxu0 0.0
    %294 = vmatprep.subr.mxu0 0.0
    %295 = vmatpush1.msra.mxu0 0.0
    %296 = vmatprep.subr.mxu0 0.0
    %297 = vmatpush1.msra.mxu0 0.0
    %298 = vmatprep.subr.mxu0 0.0
    %299 = vmatpush1.msra.mxu0 0.0
    %300 = vmatprep.subr.mxu0 0.0
    %301 = vmatpush1.msra.mxu0 0.0
    %302 = vmatprep.subr.mxu0 0.0
    %303 = vmatpush1.msra.mxu0 0.0
    %304 = vmatprep.subr.mxu0 0.0
    %305 = vmatpush1.msra.mxu0 0.0
    %306 = vmatprep.subr.mxu0 0.0
    %307 = vmatpush1.msra.mxu0 0.0
    %308 = vmatprep.mubr.f32.mxu0 0.0
    %309 = vmatmul.mubr.f32.gmra.mrb[0].mxu0 %v242
    %v310 = vpop.f32.mrb[0].mxu0
    %v311 = vadd.f32 0.0, %v310
    %v312 = vpop.f32.mrb[0].mxu0
    %313 = vdwg.mxu0
    %v314 = vadd.f32 %v177, %v311
    %v315 = vxor.u32 %v314, 2147483648
    %v316 = vmul.f32 %v315, 1.442695
    %v317 = vpow.pop %v316
    %v318 = vadd.f32 %v317, 1.0
    %v319 = vrcp.pop %v318
    %v320 = vmul.f32 1.0, %v319
    %v321 = vtanh.pop %v314
    %322 = vrot.lane.b32.xlu0 %v233, 32
    %v323 = vpop.permute.xlu0 %322
    %v325 = vmul.f32 %v320, %v323
    %327 = vrot.lane.b32.xlu0 %v321, 32
    %v328 = vpop.permute.xlu0 %327
    %v330 = vmul.f32 %v320, %v328
    %332 = vrot.lane.b32.xlu0 %v330, 32
    %v333 = vpop.permute.xlu0 %332
    %v335 = vadd.f32 %v325, %v333
    %v336 = vtanh.pop %v335
    %338 = vrot.lane.b32.xlu0 %v336, 32
    %v339 = vpop.permute.xlu0 %338
    %v341 = vmul.f32 %v320, %v339
    %343 = vrot.lane.b32.xlu0 %v341, 64
    %v344 = vpop.permute.xlu0 %343
    %346 = vrot.lane.b32.xlu0 %v227, 32
    %v347 = vpop.permute.xlu0 %346
    %v349 = vsel %vm241, %v344, %v347
    %vm350 = vcmask 523264
    %v352 = vsel %vm350, %v349, 0
    %354 = vmatprep.subr.mxu0 0.0
    %355 = vmatpush1.msra.mxu0 %v53
    %356 = vmatprep.subr.mxu0 0.0
    %357 = vmatpush1.msra.mxu0 %v54
    %358 = vmatprep.subr.mxu0 0.0
    %359 = vmatpush1.msra.mxu0 %v55
    %360 = vmatprep.subr.mxu0 0.0
    %361 = vmatpush1.msra.mxu0 %v56
    %362 = vmatprep.subr.mxu0 0.0
    %363 = vmatpush1.msra.mxu0 %v57
    %364 = vmatprep.subr.mxu0 0.0
    %365 = vmatpush1.msra.mxu0 %v58
    %366 = vmatprep.subr.mxu0 0.0
    %367 = vmatpush1.msra.mxu0 %v59
    %368 = vmatprep.subr.mxu0 0.0
    %369 = vmatpush1.msra.mxu0 %v60
    %370 = vmatprep.subr.mxu0 0.0
    %371 = vmatpush1.msra.mxu0 0.0
    %372 = vmatprep.subr.mxu0 0.0
    %373 = vmatpush1.msra.mxu0 0.0
    %374 = vmatprep.subr.mxu0 0.0
    %375 = vmatpush1.msra.mxu0 0.0
    %376 = vmatprep.subr.mxu0 0.0
    %377 = vmatpush1.msra.mxu0 0.0
    %378 = vmatprep.subr.mxu0 0.0
    %379 = vmatpush1.msra.mxu0 0.0
    %380 = vmatprep.subr.mxu0 0.0
    %381 = vmatpush1.msra.mxu0 0.0
    %382 = vmatprep.subr.mxu0 0.0
    %383 = vmatpush1.msra.mxu0 0.0
    %384 = vmatprep.subr.mxu0 0.0
    %385 = vmatpush1.msra.mxu0 0.0
    %386 = vmatprep.subr.mxu0 0.0
    %387 = vmatpush1.msra.mxu0 0.0
    %388 = vmatprep.subr.mxu0 0.0
    %389 = vmatpush1.msra.mxu0 0.0
    %390 = vmatprep.subr.mxu0 0.0
    %391 = vmatpush1.msra.mxu0 0.0
    %392 = vmatprep.subr.mxu0 0.0
    %393 = vmatpush1.msra.mxu0 0.0
    %394 = vmatprep.subr.mxu0 0.0
    %395 = vmatpush1.msra.mxu0 0.0
    %396 = vmatprep.subr.mxu0 0.0
    %397 = vmatpush1.msra.mxu0 0.0
    %398 = vmatprep.subr.mxu0 0.0
    %399 = vmatpush1.msra.mxu0 0.0
    %400 = vmatprep.subr.mxu0 0.0
    %401 = vmatpush1.msra.mxu0 0.0
    %402 = vmatprep.subr.mxu0 0.0
    %403 = vmatpush1.msra.mxu0 0.0
    %404 = vmatprep.subr.mxu0 0.0
    %405 = vmatpush1.msra.mxu0 0.0
    %406 = vmatprep.subr.mxu0 0.0
    %407 = vmatpush1.msra.mxu0 0.0
    %408 = vmatprep.subr.mxu0 0.0
    %409 = vmatpush1.msra.mxu0 0.0
    %410 = vmatprep.subr.mxu0 0.0
    %411 = vmatpush1.msra.mxu0 0.0
    %412 = vmatprep.subr.mxu0 0.0
    %413 = vmatpush1.msra.mxu0 0.0
    %414 = vmatprep.subr.mxu0 0.0
    %415 = vmatpush1.msra.mxu0 0.0
    %416 = vmatprep.subr.mxu0 0.0
    %417 = vmatpush1.msra.mxu0 0.0
    %418 = vmatprep.mubr.f32.mxu0 0.0
    %419 = vmatmul.mubr.f32.gmra.mrb[0].mxu0 %v352
    %v420 = vpop.f32.mrb[0].mxu0
    %v421 = vadd.f32 %v66, %v420
    %v422 = vpop.f32.mrb[0].mxu0
    %423 = vdwg.mxu0
    %v424 = vxor.u32 %v421, 2147483648
    %v425 = vmul.f32 %v424, 1.442695
    %v426 = vpow.pop %v425
    %v427 = vadd.f32 %v426, 1.0
    %v428 = vrcp.pop %v427
    %v429 = vmul.f32 1.0, %v428
    %v430 = vtanh.pop %v421
    %431 = vrot.lane.b32.xlu0 %v240, 32
    %v432 = vpop.permute.xlu0 %431
    %v434 = vmul.f32 %v429, %v432
    %436 = vrot.lane.b32.xlu0 %v430, 32
    %v437 = vpop.permute.xlu0 %436
    %v439 = vmul.f32 %v429, %v437
    %441 = vrot.lane.b32.xlu0 %v439, 32
    %v442 = vpop.permute.xlu0 %441
    %v444 = vadd.f32 %v434, %v442
    %v445 = vtanh.pop %v444
    %447 = vrot.lane.b32.xlu0 %v445, 32
    %v448 = vpop.permute.xlu0 %447
    %v450 = vmul.f32 %v429, %v448
    %v451 = vsel %vm241, %v344, 0
    %453 = vmatprep.subr.mxu0 0.0
    %454 = vmatpush1.msra.mxu0 %v49
    %455 = vmatprep.subr.mxu0 0.0
    %456 = vmatpush1.msra.mxu0 %v50
    %457 = vmatprep.subr.mxu0 0.0
    %458 = vmatpush1.msra.mxu0 %v51
    %459 = vmatprep.subr.mxu0 0.0
    %460 = vmatpush1.msra.mxu0 %v52
    %461 = vmatprep.subr.mxu0 0.0
    %462 = vmatpush1.msra.mxu0 0.0
    %463 = vmatprep.subr.mxu0 0.0
    %464 = vmatpush1.msra.mxu0 0.0
    %465 = vmatprep.subr.mxu0 0.0
    %466 = vmatpush1.msra.mxu0 0.0
    %467 = vmatprep.subr.mxu0 0.0
    %468 = vmatpush1.msra.mxu0 0.0
    %469 = vmatprep.subr.mxu0 0.0
    %470 = vmatpush1.msra.mxu0 0.0
    %471 = vmatprep.subr.mxu0 0.0
    %472 = vmatpush1.msra.mxu0 0.0
    %473 = vmatprep.subr.mxu0 0.0
    %474 = vmatpush1.msra.mxu0 0.0
    %475 = vmatprep.subr.mxu0 0.0
    %476 = vmatpush1.msra.mxu0 0.0
    %477 = vmatprep.subr.mxu0 0.0
    %478 = vmatpush1.msra.mxu0 0.0
    %479 = vmatprep.subr.mxu0 0.0
    %480 = vmatpush1.msra.mxu0 0.0
    %481 = vmatprep.subr.mxu0 0.0
    %482 = vmatpush1.msra.mxu0 0.0
    %483 = vmatprep.subr.mxu0 0.0
    %484 = vmatpush1.msra.mxu0 0.0
    %485 = vmatprep.subr.mxu0 0.0
    %486 = vmatpush1.msra.mxu0 0.0
    %487 = vmatprep.subr.mxu0 0.0
    %488 = vmatpush1.msra.mxu0 0.0
    %489 = vmatprep.subr.mxu0 0.0
    %490 = vmatpush1.msra.mxu0 0.0
    %491 = vmatprep.subr.mxu0 0.0
    %492 = vmatpush1.msra.mxu0 0.0
    %493 = vmatprep.subr.mxu0 0.0
    %494 = vmatpush1.msra.mxu0 0.0
    %495 = vmatprep.subr.mxu0 0.0
    %496 = vmatpush1.msra.mxu0 0.0
    %497 = vmatprep.subr.mxu0 0.0
    %498 = vmatpush1.msra.mxu0 0.0
    %499 = vmatprep.subr.mxu0 0.0
    %500 = vmatpush1.msra.mxu0 0.0
    %501 = vmatprep.subr.mxu0 0.0
    %502 = vmatpush1.msra.mxu0 0.0
    %503 = vmatprep.subr.mxu0 0.0
    %504 = vmatpush1.msra.mxu0 0.0
    %505 = vmatprep.subr.mxu0 0.0
    %506 = vmatpush1.msra.mxu0 0.0
    %507 = vmatprep.subr.mxu0 0.0
    %508 = vmatpush1.msra.mxu0 0.0
    %509 = vmatprep.subr.mxu0 0.0
    %510 = vmatpush1.msra.mxu0 0.0
    %511 = vmatprep.subr.mxu0 0.0
    %512 = vmatpush1.msra.mxu0 0.0
    %513 = vmatprep.subr.mxu0 0.0
    %514 = vmatpush1.msra.mxu0 0.0
    %515 = vmatprep.subr.mxu0 0.0
    %516 = vmatpush1.msra.mxu0 0.0
    %517 = vmatprep.mubr.f32.mxu0 0.0
    %518 = vmatmul.mubr.f32.gmra.mrb[0].mxu0 %v451
    %v519 = vpop.f32.mrb[0].mxu0
    %v520 = vadd.f32 0.0, %v519
    %v521 = vpop.f32.mrb[0].mxu0
    %522 = vdwg.mxu0
    %v523 = vadd.f32 %v182, %v520
    %v524 = vxor.u32 %v523, 2147483648
    %v525 = vmul.f32 %v524, 1.442695
    %v526 = vpow.pop %v525
    %v527 = vadd.f32 %v526, 1.0
    %v528 = vrcp.pop %v527
    %v529 = vmul.f32 1.0, %v528
    %v530 = vtanh.pop %v523
    %v531 = vmul.f32 %v529, %v335
    %533 = vrot.lane.b32.xlu0 %v530, 32
    %v534 = vpop.permute.xlu0 %533
    %v536 = vmul.f32 %v529, %v534
    %538 = vrot.lane.b32.xlu0 %v536, 32
    %v539 = vpop.permute.xlu0 %538
    %v541 = vadd.f32 %v531, %v539
    %v542 = vtanh.pop %v541
    %544 = vrot.lane.b32.xlu0 %v542, 32
    %v545 = vpop.permute.xlu0 %544
    %v547 = vmul.f32 %v529, %v545
    %549 = vrot.lane.b32.xlu0 %v547, 64
    %v550 = vpop.permute.xlu0 %549
    %553 = vrot.lane.b32.xlu0 %v450, 96
    %v554 = vpop.permute.xlu0 %553
    %v556 = vsel %vm241, %v550, %v554
    %v558 = vsel %vm350, %v556, 0
    %560 = vmatprep.subr.mxu0 0.0
    %561 = vmatpush1.msra.mxu0 %v53
    %562 = vmatprep.subr.mxu0 0.0
    %563 = vmatpush1.msra.mxu0 %v54
    %564 = vmatprep.subr.mxu0 0.0
    %565 = vmatpush1.msra.mxu0 %v55
    %566 = vmatprep.subr.mxu0 0.0
    %567 = vmatpush1.msra.mxu0 %v56
    %568 = vmatprep.subr.mxu0 0.0
    %569 = vmatpush1.msra.mxu0 %v57
    %570 = vmatprep.subr.mxu0 0.0
    %571 = vmatpush1.msra.mxu0 %v58
    %572 = vmatprep.subr.mxu0 0.0
    %573 = vmatpush1.msra.mxu0 %v59
    %574 = vmatprep.subr.mxu0 0.0
    %575 = vmatpush1.msra.mxu0 %v60
    %576 = vmatprep.subr.mxu0 0.0
    %577 = vmatpush1.msra.mxu0 0.0
    %578 = vmatprep.subr.mxu0 0.0
    %579 = vmatpush1.msra.mxu0 0.0
    %580 = vmatprep.subr.mxu0 0.0
    %581 = vmatpush1.msra.mxu0 0.0
    %582 = vmatprep.subr.mxu0 0.0
    %583 = vmatpush1.msra.mxu0 0.0
    %584 = vmatprep.subr.mxu0 0.0
    %585 = vmatpush1.msra.mxu0 0.0
    %586 = vmatprep.subr.mxu0 0.0
    %587 = vmatpush1.msra.mxu0 0.0
    %588 = vmatprep.subr.mxu0 0.0
    %589 = vmatpush1.msra.mxu0 0.0
    %590 = vmatprep.subr.mxu0 0.0
    %591 = vmatpush1.msra.mxu0 0.0
    %592 = vmatprep.subr.mxu0 0.0
    %593 = vmatpush1.msra.mxu0 0.0
    %594 = vmatprep.subr.mxu0 0.0
    %595 = vmatpush1.msra.mxu0 0.0
    %596 = vmatprep.subr.mxu0 0.0
    %597 = vmatpush1.msra.mxu0 0.0
    %598 = vmatprep.subr.mxu0 0.0
    %599 = vmatpush1.msra.mxu0 0.0
    %600 = vmatprep.subr.mxu0 0.0
    %601 = vmatpush1.msra.mxu0 0.0
    %602 = vmatprep.subr.mxu0 0.0
    %603 = vmatpush1.msra.mxu0 0.0
    %604 = vmatprep.subr.mxu0 0.0
    %605 = vmatpush1.msra.mxu0 0.0
    %606 = vmatprep.subr.mxu0 0.0
    %607 = vmatpush1.msra.mxu0 0.0
    %608 = vmatprep.subr.mxu0 0.0
    %609 = vmatpush1.msra.mxu0 0.0
    %610 = vmatprep.subr.mxu0 0.0
    %611 = vmatpush1.msra.mxu0 0.0
    %612 = vmatprep.subr.mxu0 0.0
    %613 = vmatpush1.msra.mxu0 0.0
    %614 = vmatprep.subr.mxu0 0.0
    %615 = vmatpush1.msra.mxu0 0.0
    %616 = vmatprep.subr.mxu0 0.0
    %617 = vmatpush1.msra.mxu0 0.0
    %618 = vmatprep.subr.mxu0 0.0
    %619 = vmatpush1.msra.mxu0 0.0
    %620 = vmatprep.subr.mxu0 0.0
    %621 = vmatpush1.msra.mxu0 0.0
    %622 = vmatprep.subr.mxu0 0.0
    %623 = vmatpush1.msra.mxu0 0.0
    %624 = vmatprep.mubr.f32.mxu0 0.0
    %625 = vmatmul.mubr.f32.gmra.mrb[0].mxu0 %v558
    %v626 = vpop.f32.mrb[0].mxu0
    %v627 = vadd.f32 %v66, %v626
    %v628 = vpop.f32.mrb[0].mxu0
    %629 = vdwg.mxu0
    %v630 = vxor.u32 %v627, 2147483648
    %v631 = vmul.f32 %v630, 1.442695
    %v632 = vpow.pop %v631
    %v633 = vadd.f32 %v632, 1.0
    %v634 = vrcp.pop %v633
    %v635 = vmul.f32 1.0, %v634
    %v636 = vtanh.pop %v627
    %v637 = vmul.f32 %v635, %v444
    %639 = vrot.lane.b32.xlu0 %v636, 32
    %v640 = vpop.permute.xlu0 %639
    %v642 = vmul.f32 %v635, %v640
    %644 = vrot.lane.b32.xlu0 %v642, 32
    %v645 = vpop.permute.xlu0 %644
    %v647 = vadd.f32 %v637, %v645
    %v648 = vtanh.pop %v647
    %650 = vrot.lane.b32.xlu0 %v648, 32
    %v651 = vpop.permute.xlu0 %650
    %v653 = vmul.f32 %v635, %v651
    %v654 = vsel %vm241, %v550, 0
    %656 = vmatprep.subr.mxu0 0.0
    %657 = vmatpush1.msra.mxu0 %v49
    %658 = vmatprep.subr.mxu0 0.0
    %659 = vmatpush1.msra.mxu0 %v50
    %660 = vmatprep.subr.mxu0 0.0
    %661 = vmatpush1.msra.mxu0 %v51
    %662 = vmatprep.subr.mxu0 0.0
    %663 = vmatpush1.msra.mxu0 %v52
    %664 = vmatprep.subr.mxu0 0.0
    %665 = vmatpush1.msra.mxu0 0.0
    %666 = vmatprep.subr.mxu0 0.0
    %667 = vmatpush1.msra.mxu0 0.0
    %668 = vmatprep.subr.mxu0 0.0
    %669 = vmatpush1.msra.mxu0 0.0
    %670 = vmatprep.subr.mxu0 0.0
    %671 = vmatpush1.msra.mxu0 0.0
    %672 = vmatprep.subr.mxu0 0.0
    %673 = vmatpush1.msra.mxu0 0.0
    %674 = vmatprep.subr.mxu0 0.0
    %675 = vmatpush1.msra.mxu0 0.0
    %676 = vmatprep.subr.mxu0 0.0
    %677 = vmatpush1.msra.mxu0 0.0
    %678 = vmatprep.subr.mxu0 0.0
    %679 = vmatpush1.msra.mxu0 0.0
    %680 = vmatprep.subr.mxu0 0.0
    %681 = vmatpush1.msra.mxu0 0.0
    %682 = vmatprep.subr.mxu0 0.0
    %683 = vmatpush1.msra.mxu0 0.0
    %684 = vmatprep.subr.mxu0 0.0
    %685 = vmatpush1.msra.mxu0 0.0
    %686 = vmatprep.subr.mxu0 0.0
    %687 = vmatpush1.msra.mxu0 0.0
    %688 = vmatprep.subr.mxu0 0.0
    %689 = vmatpush1.msra.mxu0 0.0
    %690 = vmatprep.subr.mxu0 0.0
    %691 = vmatpush1.msra.mxu0 0.0
    %692 = vmatprep.subr.mxu0 0.0
    %693 = vmatpush1.msra.mxu0 0.0
    %694 = vmatprep.subr.mxu0 0.0
    %695 = vmatpush1.msra.mxu0 0.0
    %696 = vmatprep.subr.mxu0 0.0
    %697 = vmatpush1.msra.mxu0 0.0
    %698 = vmatprep.subr.mxu0 0.0
    %699 = vmatpush1.msra.mxu0 0.0
    %700 = vmatprep.subr.mxu0 0.0
    %701 = vmatpush1.msra.mxu0 0.0
    %702 = vmatprep.subr.mxu0 0.0
    %703 = vmatpush1.msra.mxu0 0.0
    %704 = vmatprep.subr.mxu0 0.0
    %705 = vmatpush1.msra.mxu0 0.0
    %706 = vmatprep.subr.mxu0 0.0
    %707 = vmatpush1.msra.mxu0 0.0
    %708 = vmatprep.subr.mxu0 0.0
    %709 = vmatpush1.msra.mxu0 0.0
    %710 = vmatprep.subr.mxu0 0.0
    %711 = vmatpush1.msra.mxu0 0.0
    %712 = vmatprep.subr.mxu0 0.0
    %713 = vmatpush1.msra.mxu0 0.0
    %714 = vmatprep.subr.mxu0 0.0
    %715 = vmatpush1.msra.mxu0 0.0
    %716 = vmatprep.subr.mxu0 0.0
    %717 = vmatpush1.msra.mxu0 0.0
    %718 = vmatprep.subr.mxu0 0.0
    %719 = vmatpush1.msra.mxu0 0.0
    %720 = vmatprep.mubr.f32.mxu0 0.0
    %721 = vmatmul.mubr.f32.gmra.mrb[0].mxu0 %v654
    %v722 = vpop.f32.mrb[0].mxu0
    %v723 = vadd.f32 0.0, %v722
    %v724 = vpop.f32.mrb[0].mxu0
    %725 = vdwg.mxu0
    %v726 = vadd.f32 %v187, %v723
    %v727 = vxor.u32 %v726, 2147483648
    %v728 = vmul.f32 %v727, 1.442695
    %v729 = vpow.pop %v728
    %v730 = vadd.f32 %v729, 1.0
    %v731 = vrcp.pop %v730
    %v732 = vmul.f32 1.0, %v731
    %v733 = vtanh.pop %v726
    %v734 = vmul.f32 %v732, %v541
    %736 = vrot.lane.b32.xlu0 %v733, 32
    %v737 = vpop.permute.xlu0 %736
    %v739 = vmul.f32 %v732, %v737
    %741 = vrot.lane.b32.xlu0 %v739, 32
    %v742 = vpop.permute.xlu0 %741
    %v744 = vadd.f32 %v734, %v742
    %v745 = vtanh.pop %v744
    %747 = vrot.lane.b32.xlu0 %v745, 32
    %v748 = vpop.permute.xlu0 %747
    %v750 = vmul.f32 %v732, %v748
    %752 = vrot.lane.b32.xlu0 %v750, 64
    %v753 = vpop.permute.xlu0 %752
    %756 = vrot.lane.b32.xlu0 %v653, 96
    %v757 = vpop.permute.xlu0 %756
    %v759 = vsel %vm241, %v753, %v757
    %v761 = vsel %vm350, %v759, 0
    %763 = vmatprep.subr.mxu0 0.0
    %764 = vmatpush1.msra.mxu0 %v53
    %765 = vmatprep.subr.mxu0 0.0
    %766 = vmatpush1.msra.mxu0 %v54
    %767 = vmatprep.subr.mxu0 0.0
    %768 = vmatpush1.msra.mxu0 %v55
    %769 = vmatprep.subr.mxu0 0.0
    %770 = vmatpush1.msra.mxu0 %v56
    %771 = vmatprep.subr.mxu0 0.0
    %772 = vmatpush1.msra.mxu0 %v57
    %773 = vmatprep.subr.mxu0 0.0
    %774 = vmatpush1.msra.mxu0 %v58
    %775 = vmatprep.subr.mxu0 0.0
    %776 = vmatpush1.msra.mxu0 %v59
    %777 = vmatprep.subr.mxu0 0.0
    %778 = vmatpush1.msra.mxu0 %v60
    %779 = vmatprep.subr.mxu0 0.0
    %780 = vmatpush1.msra.mxu0 0.0
    %781 = vmatprep.subr.mxu0 0.0
    %782 = vmatpush1.msra.mxu0 0.0
    %783 = vmatprep.subr.mxu0 0.0
    %784 = vmatpush1.msra.mxu0 0.0
    %785 = vmatprep.subr.mxu0 0.0
    %786 = vmatpush1.msra.mxu0 0.0
    %787 = vmatprep.subr.mxu0 0.0
    %788 = vmatpush1.msra.mxu0 0.0
    %789 = vmatprep.subr.mxu0 0.0
    %790 = vmatpush1.msra.mxu0 0.0
    %791 = vmatprep.subr.mxu0 0.0
    %792 = vmatpush1.msra.mxu0 0.0
    %793 = vmatprep.subr.mxu0 0.0
    %794 = vmatpush1.msra.mxu0 0.0
    %795 = vmatprep.subr.mxu0 0.0
    %796 = vmatpush1.msra.mxu0 0.0
    %797 = vmatprep.subr.mxu0 0.0
    %798 = vmatpush1.msra.mxu0 0.0
    %799 = vmatprep.subr.mxu0 0.0
    %800 = vmatpush1.msra.mxu0 0.0
    %801 = vmatprep.subr.mxu0 0.0
    %802 = vmatpush1.msra.mxu0 0.0
    %803 = vmatprep.subr.mxu0 0.0
    %804 = vmatpush1.msra.mxu0 0.0
    %805 = vmatprep.subr.mxu0 0.0
    %806 = vmatpush1.msra.mxu0 0.0
    %807 = vmatprep.subr.mxu0 0.0
    %808 = vmatpush1.msra.mxu0 0.0
    %809 = vmatprep.subr.mxu0 0.0
    %810 = vmatpush1.msra.mxu0 0.0
    %811 = vmatprep.subr.mxu0 0.0
    %812 = vmatpush1.msra.mxu0 0.0
    %813 = vmatprep.subr.mxu0 0.0
    %814 = vmatpush1.msra.mxu0 0.0
    %815 = vmatprep.subr.mxu0 0.0
    %816 = vmatpush1.msra.mxu0 0.0
    %817 = vmatprep.subr.mxu0 0.0
    %818 = vmatpush1.msra.mxu0 0.0
    %819 = vmatprep.subr.mxu0 0.0
    %820 = vmatpush1.msra.mxu0 0.0
    %821 = vmatprep.subr.mxu0 0.0
    %822 = vmatpush1.msra.mxu0 0.0
    %823 = vmatprep.subr.mxu0 0.0
    %824 = vmatpush1.msra.mxu0 0.0
    %825 = vmatprep.subr.mxu0 0.0
    %826 = vmatpush1.msra.mxu0 0.0
    %827 = vmatprep.mubr.f32.mxu0 0.0
    %828 = vmatmul.mubr.f32.gmra.mrb[0].mxu0 %v761
    %v829 = vpop.f32.mrb[0].mxu0
    %v830 = vadd.f32 %v66, %v829
    %v831 = vpop.f32.mrb[0].mxu0
    %832 = vdwg.mxu0
    %v833 = vxor.u32 %v830, 2147483648
    %v834 = vmul.f32 %v833, 1.442695
    %v835 = vpow.pop %v834
    %v836 = vadd.f32 %v835, 1.0
    %v837 = vrcp.pop %v836
    %v838 = vmul.f32 1.0, %v837
    %v839 = vtanh.pop %v830
    %v840 = vmul.f32 %v838, %v647
    %842 = vrot.lane.b32.xlu0 %v839, 32
    %v843 = vpop.permute.xlu0 %842
    %v845 = vmul.f32 %v838, %v843
    %847 = vrot.lane.b32.xlu0 %v845, 32
    %v848 = vpop.permute.xlu0 %847
    %v850 = vadd.f32 %v840, %v848
    %v851 = vtanh.pop %v850
    %853 = vrot.lane.b32.xlu0 %v851, 32
    %v854 = vpop.permute.xlu0 %853
    %v856 = vmul.f32 %v838, %v854
    %v857 = vsel %vm241, %v753, 0
    %859 = vmatprep.subr.mxu0 0.0
    %860 = vmatpush1.msra.mxu0 %v49
    %861 = vmatprep.subr.mxu0 0.0
    %862 = vmatpush1.msra.mxu0 %v50
    %863 = vmatprep.subr.mxu0 0.0
    %864 = vmatpush1.msra.mxu0 %v51
    %865 = vmatprep.subr.mxu0 0.0
    %866 = vmatpush1.msra.mxu0 %v52
    %867 = vmatprep.subr.mxu0 0.0
    %868 = vmatpush1.msra.mxu0 0.0
    %869 = vmatprep.subr.mxu0 0.0
    %870 = vmatpush1.msra.mxu0 0.0
    %871 = vmatprep.subr.mxu0 0.0
    %872 = vmatpush1.msra.mxu0 0.0
    %873 = vmatprep.subr.mxu0 0.0
    %874 = vmatpush1.msra.mxu0 0.0
    %875 = vmatprep.subr.mxu0 0.0
    %876 = vmatpush1.msra.mxu0 0.0
    %877 = vmatprep.subr.mxu0 0.0
    %878 = vmatpush1.msra.mxu0 0.0
    %879 = vmatprep.subr.mxu0 0.0
    %880 = vmatpush1.msra.mxu0 0.0
    %881 = vmatprep.subr.mxu0 0.0
    %882 = vmatpush1.msra.mxu0 0.0
    %883 = vmatprep.subr.mxu0 0.0
    %884 = vmatpush1.msra.mxu0 0.0
    %885 = vmatprep.subr.mxu0 0.0
    %886 = vmatpush1.msra.mxu0 0.0
    %887 = vmatprep.subr.mxu0 0.0
    %888 = vmatpush1.msra.mxu0 0.0
    %889 = vmatprep.subr.mxu0 0.0
    %890 = vmatpush1.msra.mxu0 0.0
    %891 = vmatprep.subr.mxu0 0.0
    %892 = vmatpush1.msra.mxu0 0.0
    %893 = vmatprep.subr.mxu0 0.0
    %894 = vmatpush1.msra.mxu0 0.0
    %895 = vmatprep.subr.mxu0 0.0
    %896 = vmatpush1.msra.mxu0 0.0
    %897 = vmatprep.subr.mxu0 0.0
    %898 = vmatpush1.msra.mxu0 0.0
    %899 = vmatprep.subr.mxu0 0.0
    %900 = vmatpush1.msra.mxu0 0.0
    %901 = vmatprep.subr.mxu0 0.0
    %902 = vmatpush1.msra.mxu0 0.0
    %903 = vmatprep.subr.mxu0 0.0
    %904 = vmatpush1.msra.mxu0 0.0
    %905 = vmatprep.subr.mxu0 0.0
    %906 = vmatpush1.msra.mxu0 0.0
    %907 = vmatprep.subr.mxu0 0.0
    %908 = vmatpush1.msra.mxu0 0.0
    %909 = vmatprep.subr.mxu0 0.0
    %910 = vmatpush1.msra.mxu0 0.0
    %911 = vmatprep.subr.mxu0 0.0
    %912 = vmatpush1.msra.mxu0 0.0
    %913 = vmatprep.subr.mxu0 0.0
    %914 = vmatpush1.msra.mxu0 0.0
    %915 = vmatprep.subr.mxu0 0.0
    %916 = vmatpush1.msra.mxu0 0.0
    %917 = vmatprep.subr.mxu0 0.0
    %918 = vmatpush1.msra.mxu0 0.0
    %919 = vmatprep.subr.mxu0 0.0
    %920 = vmatpush1.msra.mxu0 0.0
    %921 = vmatprep.subr.mxu0 0.0
    %922 = vmatpush1.msra.mxu0 0.0
    %923 = vmatprep.mubr.f32.mxu0 0.0
    %924 = vmatmul.mubr.f32.gmra.mrb[0].mxu0 %v857
    %v925 = vpop.f32.mrb[0].mxu0
    %v926 = vadd.f32 0.0, %v925
    %v927 = vpop.f32.mrb[0].mxu0
    %928 = vdwg.mxu0
    %v929 = vadd.f32 %v192, %v926
    %v930 = vxor.u32 %v929, 2147483648
    %v931 = vmul.f32 %v930, 1.442695
    %v932 = vpow.pop %v931
    %v933 = vadd.f32 %v932, 1.0
    %v934 = vrcp.pop %v933
    %v935 = vmul.f32 1.0, %v934
    %v936 = vtanh.pop %v929
    %v937 = vmul.f32 %v935, %v744
    %939 = vrot.lane.b32.xlu0 %v936, 32
    %v940 = vpop.permute.xlu0 %939
    %v942 = vmul.f32 %v935, %v940
    %944 = vrot.lane.b32.xlu0 %v942, 32
    %v945 = vpop.permute.xlu0 %944
    %v947 = vadd.f32 %v937, %v945
    %v948 = vtanh.pop %v947
    %950 = vrot.lane.b32.xlu0 %v948, 32
    %v951 = vpop.permute.xlu0 %950
    %v953 = vmul.f32 %v935, %v951
    %955 = vrot.lane.b32.xlu0 %v953, 64
    %v956 = vpop.permute.xlu0 %955
    %959 = vrot.lane.b32.xlu0 %v856, 96
    %v960 = vpop.permute.xlu0 %959
    %v962 = vsel %vm241, %v956, %v960
    %v964 = vsel %vm350, %v962, 0
    %966 = vmatprep.subr.mxu0 0.0
    %967 = vmatpush1.msra.mxu0 %v53
    %968 = vmatprep.subr.mxu0 0.0
    %969 = vmatpush1.msra.mxu0 %v54
    %970 = vmatprep.subr.mxu0 0.0
    %971 = vmatpush1.msra.mxu0 %v55
    %972 = vmatprep.subr.mxu0 0.0
    %973 = vmatpush1.msra.mxu0 %v56
    %974 = vmatprep.subr.mxu0 0.0
    %975 = vmatpush1.msra.mxu0 %v57
    %976 = vmatprep.subr.mxu0 0.0
    %977 = vmatpush1.msra.mxu0 %v58
    %978 = vmatprep.subr.mxu0 0.0
    %979 = vmatpush1.msra.mxu0 %v59
    %980 = vmatprep.subr.mxu0 0.0
    %981 = vmatpush1.msra.mxu0 %v60
    %982 = vmatprep.subr.mxu0 0.0
    %983 = vmatpush1.msra.mxu0 0.0
    %984 = vmatprep.subr.mxu0 0.0
    %985 = vmatpush1.msra.mxu0 0.0
    %986 = vmatprep.subr.mxu0 0.0
    %987 = vmatpush1.msra.mxu0 0.0
    %988 = vmatprep.subr.mxu0 0.0
    %989 = vmatpush1.msra.mxu0 0.0
    %990 = vmatprep.subr.mxu0 0.0
    %991 = vmatpush1.msra.mxu0 0.0
    %992 = vmatprep.subr.mxu0 0.0
    %993 = vmatpush1.msra.mxu0 0.0
    %994 = vmatprep.subr.mxu0 0.0
    %995 = vmatpush1.msra.mxu0 0.0
    %996 = vmatprep.subr.mxu0 0.0
    %997 = vmatpush1.msra.mxu0 0.0
    %998 = vmatprep.subr.mxu0 0.0
    %999 = vmatpush1.msra.mxu0 0.0
    %1000 = vmatprep.subr.mxu0 0.0
    %1001 = vmatpush1.msra.mxu0 0.0
    %1002 = vmatprep.subr.mxu0 0.0
    %1003 = vmatpush1.msra.mxu0 0.0
    %1004 = vmatprep.subr.mxu0 0.0
    %1005 = vmatpush1.msra.mxu0 0.0
    %1006 = vmatprep.subr.mxu0 0.0
    %1007 = vmatpush1.msra.mxu0 0.0
    %1008 = vmatprep.subr.mxu0 0.0
    %1009 = vmatpush1.msra.mxu0 0.0
    %1010 = vmatprep.subr.mxu0 0.0
    %1011 = vmatpush1.msra.mxu0 0.0
    %1012 = vmatprep.subr.mxu0 0.0
    %1013 = vmatpush1.msra.mxu0 0.0
    %1014 = vmatprep.subr.mxu0 0.0
    %1015 = vmatpush1.msra.mxu0 0.0
    %1016 = vmatprep.subr.mxu0 0.0
    %1017 = vmatpush1.msra.mxu0 0.0
    %1018 = vmatprep.subr.mxu0 0.0
    %1019 = vmatpush1.msra.mxu0 0.0
    %1020 = vmatprep.subr.mxu0 0.0
    %1021 = vmatpush1.msra.mxu0 0.0
    %1022 = vmatprep.subr.mxu0 0.0
    %1023 = vmatpush1.msra.mxu0 0.0
    %1024 = vmatprep.subr.mxu0 0.0
    %1025 = vmatpush1.msra.mxu0 0.0
    %1026 = vmatprep.subr.mxu0 0.0
    %1027 = vmatpush1.msra.mxu0 0.0
    %1028 = vmatprep.subr.mxu0 0.0
    %1029 = vmatpush1.msra.mxu0 0.0
    %1030 = vmatprep.mubr.f32.mxu0 0.0
    %1031 = vmatmul.mubr.f32.gmra.mrb[0].mxu0 %v964
    %v1032 = vpop.f32.mrb[0].mxu0
    %v1033 = vadd.f32 %v66, %v1032
    %v1034 = vpop.f32.mrb[0].mxu0
    %1035 = vdwg.mxu0
    %v1036 = vxor.u32 %v1033, 2147483648
    %v1037 = vmul.f32 %v1036, 1.442695
    %v1038 = vpow.pop %v1037
    %v1039 = vadd.f32 %v1038, 1.0
    %v1040 = vrcp.pop %v1039
    %v1041 = vmul.f32 1.0, %v1040
    %v1042 = vtanh.pop %v1033
    %v1043 = vmul.f32 %v1041, %v850
    %1045 = vrot.lane.b32.xlu0 %v1042, 32
    %v1046 = vpop.permute.xlu0 %1045
    %v1048 = vmul.f32 %v1041, %v1046
    %1050 = vrot.lane.b32.xlu0 %v1048, 32
    %v1051 = vpop.permute.xlu0 %1050
    %v1053 = vadd.f32 %v1043, %v1051
    %v1054 = vtanh.pop %v1053
    %1056 = vrot.lane.b32.xlu0 %v1054, 32
    %v1057 = vpop.permute.xlu0 %1056
    %v1059 = vmul.f32 %v1041, %v1057
    %v1060 = vsel %vm241, %v956, 0
    %1062 = vmatprep.subr.mxu0 0.0
    %1063 = vmatpush1.msra.mxu0 %v49
    %1064 = vmatprep.subr.mxu0 0.0
    %1065 = vmatpush1.msra.mxu0 %v50
    %1066 = vmatprep.subr.mxu0 0.0
    %1067 = vmatpush1.msra.mxu0 %v51
    %1068 = vmatprep.subr.mxu0 0.0
    %1069 = vmatpush1.msra.mxu0 %v52
    %1070 = vmatprep.subr.mxu0 0.0
    %1071 = vmatpush1.msra.mxu0 0.0
    %1072 = vmatprep.subr.mxu0 0.0
    %1073 = vmatpush1.msra.mxu0 0.0
    %1074 = vmatprep.subr.mxu0 0.0
    %1075 = vmatpush1.msra.mxu0 0.0
    %1076 = vmatprep.subr.mxu0 0.0
    %1077 = vmatpush1.msra.mxu0 0.0
    %1078 = vmatprep.subr.mxu0 0.0
    %1079 = vmatpush1.msra.mxu0 0.0
    %1080 = vmatprep.subr.mxu0 0.0
    %1081 = vmatpush1.msra.mxu0 0.0
    %1082 = vmatprep.subr.mxu0 0.0
    %1083 = vmatpush1.msra.mxu0 0.0
    %1084 = vmatprep.subr.mxu0 0.0
    %1085 = vmatpush1.msra.mxu0 0.0
    %1086 = vmatprep.subr.mxu0 0.0
    %1087 = vmatpush1.msra.mxu0 0.0
    %1088 = vmatprep.subr.mxu0 0.0
    %1089 = vmatpush1.msra.mxu0 0.0
    %1090 = vmatprep.subr.mxu0 0.0
    %1091 = vmatpush1.msra.mxu0 0.0
    %1092 = vmatprep.subr.mxu0 0.0
    %1093 = vmatpush1.msra.mxu0 0.0
    %1094 = vmatprep.subr.mxu0 0.0
    %1095 = vmatpush1.msra.mxu0 0.0
    %1096 = vmatprep.subr.mxu0 0.0
    %1097 = vmatpush1.msra.mxu0 0.0
    %1098 = vmatprep.subr.mxu0 0.0
    %1099 = vmatpush1.msra.mxu0 0.0
    %1100 = vmatprep.subr.mxu0 0.0
    %1101 = vmatpush1.msra.mxu0 0.0
    %1102 = vmatprep.subr.mxu0 0.0
    %1103 = vmatpush1.msra.mxu0 0.0
    %1104 = vmatprep.subr.mxu0 0.0
    %1105 = vmatpush1.msra.mxu0 0.0
    %1106 = vmatprep.subr.mxu0 0.0
    %1107 = vmatpush1.msra.mxu0 0.0
    %1108 = vmatprep.subr.mxu0 0.0
    %1109 = vmatpush1.msra.mxu0 0.0
    %1110 = vmatprep.subr.mxu0 0.0
    %1111 = vmatpush1.msra.mxu0 0.0
    %1112 = vmatprep.subr.mxu0 0.0
    %1113 = vmatpush1.msra.mxu0 0.0
    %1114 = vmatprep.subr.mxu0 0.0
    %1115 = vmatpush1.msra.mxu0 0.0
    %1116 = vmatprep.subr.mxu0 0.0
    %1117 = vmatpush1.msra.mxu0 0.0
    %1118 = vmatprep.subr.mxu0 0.0
    %1119 = vmatpush1.msra.mxu0 0.0
    %1120 = vmatprep.subr.mxu0 0.0
    %1121 = vmatpush1.msra.mxu0 0.0
    %1122 = vmatprep.subr.mxu0 0.0
    %1123 = vmatpush1.msra.mxu0 0.0
    %1124 = vmatprep.subr.mxu0 0.0
    %1125 = vmatpush1.msra.mxu0 0.0
    %1126 = vmatprep.mubr.f32.mxu0 0.0
    %1127 = vmatmul.mubr.f32.gmra.mrb[0].mxu0 %v1060
    %v1128 = vpop.f32.mrb[0].mxu0
    %v1129 = vadd.f32 0.0, %v1128
    %v1130 = vpop.f32.mrb[0].mxu0
    %1131 = vdwg.mxu0
    %v1132 = vadd.f32 %v197, %v1129
    %v1133 = vxor.u32 %v1132, 2147483648
    %v1134 = vmul.f32 %v1133, 1.442695
    %v1135 = vpow.pop %v1134
    %v1136 = vadd.f32 %v1135, 1.0
    %v1137 = vrcp.pop %v1136
    %v1138 = vmul.f32 1.0, %v1137
    %v1139 = vtanh.pop %v1132
    %v1140 = vmul.f32 %v1138, %v947
    %1142 = vrot.lane.b32.xlu0 %v1139, 32
    %v1143 = vpop.permute.xlu0 %1142
    %v1145 = vmul.f32 %v1138, %v1143
    %1147 = vrot.lane.b32.xlu0 %v1145, 32
    %v1148 = vpop.permute.xlu0 %1147
    %v1150 = vadd.f32 %v1140, %v1148
    %v1151 = vtanh.pop %v1150
    %1153 = vrot.lane.b32.xlu0 %v1151, 32
    %v1154 = vpop.permute.xlu0 %1153
    %v1156 = vmul.f32 %v1138, %v1154
    %1158 = vrot.lane.b32.xlu0 %v1156, 64
    %v1159 = vpop.permute.xlu0 %1158
    %1162 = vrot.lane.b32.xlu0 %v1059, 96
    %v1163 = vpop.permute.xlu0 %1162
    %v1165 = vsel %vm241, %v1159, %v1163
    %v1167 = vsel %vm350, %v1165, 0
    %1169 = vmatprep.subr.mxu0 0.0
    %1170 = vmatpush1.msra.mxu0 %v53
    %1171 = vmatprep.subr.mxu0 0.0
    %1172 = vmatpush1.msra.mxu0 %v54
    %1173 = vmatprep.subr.mxu0 0.0
    %1174 = vmatpush1.msra.mxu0 %v55
    %1175 = vmatprep.subr.mxu0 0.0
    %1176 = vmatpush1.msra.mxu0 %v56
    %1177 = vmatprep.subr.mxu0 0.0
    %1178 = vmatpush1.msra.mxu0 %v57
    %1179 = vmatprep.subr.mxu0 0.0
    %1180 = vmatpush1.msra.mxu0 %v58
    %1181 = vmatprep.subr.mxu0 0.0
    %1182 = vmatpush1.msra.mxu0 %v59
    %1183 = vmatprep.subr.mxu0 0.0
    %1184 = vmatpush1.msra.mxu0 %v60
    %1185 = vmatprep.subr.mxu0 0.0
    %1186 = vmatpush1.msra.mxu0 0.0
    %1187 = vmatprep.subr.mxu0 0.0
    %1188 = vmatpush1.msra.mxu0 0.0
    %1189 = vmatprep.subr.mxu0 0.0
    %1190 = vmatpush1.msra.mxu0 0.0
    %1191 = vmatprep.subr.mxu0 0.0
    %1192 = vmatpush1.msra.mxu0 0.0
    %1193 = vmatprep.subr.mxu0 0.0
    %1194 = vmatpush1.msra.mxu0 0.0
    %1195 = vmatprep.subr.mxu0 0.0
    %1196 = vmatpush1.msra.mxu0 0.0
    %1197 = vmatprep.subr.mxu0 0.0
    %1198 = vmatpush1.msra.mxu0 0.0
    %1199 = vmatprep.subr.mxu0 0.0
    %1200 = vmatpush1.msra.mxu0 0.0
    %1201 = vmatprep.subr.mxu0 0.0
    %1202 = vmatpush1.msra.mxu0 0.0
    %1203 = vmatprep.subr.mxu0 0.0
    %1204 = vmatpush1.msra.mxu0 0.0
    %1205 = vmatprep.subr.mxu0 0.0
    %1206 = vmatpush1.msra.mxu0 0.0
    %1207 = vmatprep.subr.mxu0 0.0
    %1208 = vmatpush1.msra.mxu0 0.0
    %1209 = vmatprep.subr.mxu0 0.0
    %1210 = vmatpush1.msra.mxu0 0.0
    %1211 = vmatprep.subr.mxu0 0.0
    %1212 = vmatpush1.msra.mxu0 0.0
    %1213 = vmatprep.subr.mxu0 0.0
    %1214 = vmatpush1.msra.mxu0 0.0
    %1215 = vmatprep.subr.mxu0 0.0
    %1216 = vmatpush1.msra.mxu0 0.0
    %1217 = vmatprep.subr.mxu0 0.0
    %1218 = vmatpush1.msra.mxu0 0.0
    %1219 = vmatprep.subr.mxu0 0.0
    %1220 = vmatpush1.msra.mxu0 0.0
    %1221 = vmatprep.subr.mxu0 0.0
    %1222 = vmatpush1.msra.mxu0 0.0
    %1223 = vmatprep.subr.mxu0 0.0
    %1224 = vmatpush1.msra.mxu0 0.0
    %1225 = vmatprep.subr.mxu0 0.0
    %1226 = vmatpush1.msra.mxu0 0.0
    %1227 = vmatprep.subr.mxu0 0.0
    %1228 = vmatpush1.msra.mxu0 0.0
    %1229 = vmatprep.subr.mxu0 0.0
    %1230 = vmatpush1.msra.mxu0 0.0
    %1231 = vmatprep.subr.mxu0 0.0
    %1232 = vmatpush1.msra.mxu0 0.0
    %1233 = vmatprep.mubr.f32.mxu0 0.0
    %1234 = vmatmul.mubr.f32.gmra.mrb[0].mxu0 %v1167
    %v1235 = vpop.f32.mrb[0].mxu0
    %v1236 = vadd.f32 %v66, %v1235
    %v1237 = vpop.f32.mrb[0].mxu0
    %1238 = vdwg.mxu0
    %v1239 = vxor.u32 %v1236, 2147483648
    %v1240 = vmul.f32 %v1239, 1.442695
    %v1241 = vpow.pop %v1240
    %v1242 = vadd.f32 %v1241, 1.0
    %v1243 = vrcp.pop %v1242
    %v1244 = vmul.f32 1.0, %v1243
    %v1245 = vtanh.pop %v1236
    %v1246 = vmul.f32 %v1244, %v1053
    %1248 = vrot.lane.b32.xlu0 %v1245, 32
    %v1249 = vpop.permute.xlu0 %1248
    %v1251 = vmul.f32 %v1244, %v1249
    %1253 = vrot.lane.b32.xlu0 %v1251, 32
    %v1254 = vpop.permute.xlu0 %1253
    %v1256 = vadd.f32 %v1246, %v1254
    %v1257 = vtanh.pop %v1256
    %1259 = vrot.lane.b32.xlu0 %v1257, 32
    %v1260 = vpop.permute.xlu0 %1259
    %v1262 = vmul.f32 %v1244, %v1260
    %v1263 = vsel %vm241, %v1159, 0
    %1265 = vmatprep.subr.mxu0 0.0
    %1266 = vmatpush1.msra.mxu0 %v49
    %1267 = vmatprep.subr.mxu0 0.0
    %1268 = vmatpush1.msra.mxu0 %v50
    %1269 = vmatprep.subr.mxu0 0.0
    %1270 = vmatpush1.msra.mxu0 %v51
    %1271 = vmatprep.subr.mxu0 0.0
    %1272 = vmatpush1.msra.mxu0 %v52
    %1273 = vmatprep.subr.mxu0 0.0
    %1274 = vmatpush1.msra.mxu0 0.0
    %1275 = vmatprep.subr.mxu0 0.0
    %1276 = vmatpush1.msra.mxu0 0.0
    %1277 = vmatprep.subr.mxu0 0.0
    %1278 = vmatpush1.msra.mxu0 0.0
    %1279 = vmatprep.subr.mxu0 0.0
    %1280 = vmatpush1.msra.mxu0 0.0
    %1281 = vmatprep.subr.mxu0 0.0
    %1282 = vmatpush1.msra.mxu0 0.0
    %1283 = vmatprep.subr.mxu0 0.0
    %1284 = vmatpush1.msra.mxu0 0.0
    %1285 = vmatprep.subr.mxu0 0.0
    %1286 = vmatpush1.msra.mxu0 0.0
    %1287 = vmatprep.subr.mxu0 0.0
    %1288 = vmatpush1.msra.mxu0 0.0
    %1289 = vmatprep.subr.mxu0 0.0
    %1290 = vmatpush1.msra.mxu0 0.0
    %1291 = vmatprep.subr.mxu0 0.0
    %1292 = vmatpush1.msra.mxu0 0.0
    %1293 = vmatprep.subr.mxu0 0.0
    %1294 = vmatpush1.msra.mxu0 0.0
    %1295 = vmatprep.subr.mxu0 0.0
    %1296 = vmatpush1.msra.mxu0 0.0
    %1297 = vmatprep.subr.mxu0 0.0
    %1298 = vmatpush1.msra.mxu0 0.0
    %1299 = vmatprep.subr.mxu0 0.0
    %1300 = vmatpush1.msra.mxu0 0.0
    %1301 = vmatprep.subr.mxu0 0.0
    %1302 = vmatpush1.msra.mxu0 0.0
    %1303 = vmatprep.subr.mxu0 0.0
    %1304 = vmatpush1.msra.mxu0 0.0
    %1305 = vmatprep.subr.mxu0 0.0
    %1306 = vmatpush1.msra.mxu0 0.0
    %1307 = vmatprep.subr.mxu0 0.0
    %1308 = vmatpush1.msra.mxu0 0.0
    %1309 = vmatprep.subr.mxu0 0.0
    %1310 = vmatpush1.msra.mxu0 0.0
    %1311 = vmatprep.subr.mxu0 0.0
    %1312 = vmatpush1.msra.mxu0 0.0
    %1313 = vmatprep.subr.mxu0 0.0
    %1314 = vmatpush1.msra.mxu0 0.0
    %1315 = vmatprep.subr.mxu0 0.0
    %1316 = vmatpush1.msra.mxu0 0.0
    %1317 = vmatprep.subr.mxu0 0.0
    %1318 = vmatpush1.msra.mxu0 0.0
    %1319 = vmatprep.subr.mxu0 0.0
    %1320 = vmatpush1.msra.mxu0 0.0
    %1321 = vmatprep.subr.mxu0 0.0
    %1322 = vmatpush1.msra.mxu0 0.0
    %1323 = vmatprep.subr.mxu0 0.0
    %1324 = vmatpush1.msra.mxu0 0.0
    %1325 = vmatprep.subr.mxu0 0.0
    %1326 = vmatpush1.msra.mxu0 0.0
    %1327 = vmatprep.subr.mxu0 0.0
    %1328 = vmatpush1.msra.mxu0 0.0
    %1329 = vmatprep.mubr.f32.mxu0 0.0
    %1330 = vmatmul.mubr.f32.gmra.mrb[0].mxu0 %v1263
    %v1331 = vpop.f32.mrb[0].mxu0
    %v1332 = vadd.f32 0.0, %v1331
    %v1333 = vpop.f32.mrb[0].mxu0
    %1334 = vdwg.mxu0
    %v1335 = vadd.f32 %v202, %v1332
    %v1336 = vxor.u32 %v1335, 2147483648
    %v1337 = vmul.f32 %v1336, 1.442695
    %v1338 = vpow.pop %v1337
    %v1339 = vadd.f32 %v1338, 1.0
    %v1340 = vrcp.pop %v1339
    %v1341 = vmul.f32 1.0, %v1340
    %v1342 = vtanh.pop %v1335
    %v1343 = vmul.f32 %v1341, %v1150
    %1345 = vrot.lane.b32.xlu0 %v1342, 32
    %v1346 = vpop.permute.xlu0 %1345
    %v1348 = vmul.f32 %v1341, %v1346
    %1350 = vrot.lane.b32.xlu0 %v1348, 32
    %v1351 = vpop.permute.xlu0 %1350
    %v1353 = vadd.f32 %v1343, %v1351
    %v1354 = vtanh.pop %v1353
    %1356 = vrot.lane.b32.xlu0 %v1354, 32
    %v1357 = vpop.permute.xlu0 %1356
    %v1359 = vmul.f32 %v1341, %v1357
    %1361 = vrot.lane.b32.xlu0 %v1359, 64
    %v1362 = vpop.permute.xlu0 %1361
    %1365 = vrot.lane.b32.xlu0 %v1262, 96
    %v1366 = vpop.permute.xlu0 %1365
    %v1368 = vsel %vm241, %v1362, %v1366
    %v1370 = vsel %vm350, %v1368, 0
    %1372 = vmatprep.subr.mxu0 0.0
    %1373 = vmatpush1.msra.mxu0 %v53
    %1374 = vmatprep.subr.mxu0 0.0
    %1375 = vmatpush1.msra.mxu0 %v54
    %1376 = vmatprep.subr.mxu0 0.0
    %1377 = vmatpush1.msra.mxu0 %v55
    %1378 = vmatprep.subr.mxu0 0.0
    %1379 = vmatpush1.msra.mxu0 %v56
    %1380 = vmatprep.subr.mxu0 0.0
    %1381 = vmatpush1.msra.mxu0 %v57
    %1382 = vmatprep.subr.mxu0 0.0
    %1383 = vmatpush1.msra.mxu0 %v58
    %1384 = vmatprep.subr.mxu0 0.0
    %1385 = vmatpush1.msra.mxu0 %v59
    %1386 = vmatprep.subr.mxu0 0.0
    %1387 = vmatpush1.msra.mxu0 %v60
    %1388 = vmatprep.subr.mxu0 0.0
    %1389 = vmatpush1.msra.mxu0 0.0
    %1390 = vmatprep.subr.mxu0 0.0
    %1391 = vmatpush1.msra.mxu0 0.0
    %1392 = vmatprep.subr.mxu0 0.0
    %1393 = vmatpush1.msra.mxu0 0.0
    %1394 = vmatprep.subr.mxu0 0.0
    %1395 = vmatpush1.msra.mxu0 0.0
    %1396 = vmatprep.subr.mxu0 0.0
    %1397 = vmatpush1.msra.mxu0 0.0
    %1398 = vmatprep.subr.mxu0 0.0
    %1399 = vmatpush1.msra.mxu0 0.0
    %1400 = vmatprep.subr.mxu0 0.0
    %1401 = vmatpush1.msra.mxu0 0.0
    %1402 = vmatprep.subr.mxu0 0.0
    %1403 = vmatpush1.msra.mxu0 0.0
    %1404 = vmatprep.subr.mxu0 0.0
    %1405 = vmatpush1.msra.mxu0 0.0
    %1406 = vmatprep.subr.mxu0 0.0
    %1407 = vmatpush1.msra.mxu0 0.0
    %1408 = vmatprep.subr.mxu0 0.0
    %1409 = vmatpush1.msra.mxu0 0.0
    %1410 = vmatprep.subr.mxu0 0.0
    %1411 = vmatpush1.msra.mxu0 0.0
    %1412 = vmatprep.subr.mxu0 0.0
    %1413 = vmatpush1.msra.mxu0 0.0
    %1414 = vmatprep.subr.mxu0 0.0
    %1415 = vmatpush1.msra.mxu0 0.0
    %1416 = vmatprep.subr.mxu0 0.0
    %1417 = vmatpush1.msra.mxu0 0.0
    %1418 = vmatprep.subr.mxu0 0.0
    %1419 = vmatpush1.msra.mxu0 0.0
    %1420 = vmatprep.subr.mxu0 0.0
    %1421 = vmatpush1.msra.mxu0 0.0
    %1422 = vmatprep.subr.mxu0 0.0
    %1423 = vmatpush1.msra.mxu0 0.0
    %1424 = vmatprep.subr.mxu0 0.0
    %1425 = vmatpush1.msra.mxu0 0.0
    %1426 = vmatprep.subr.mxu0 0.0
    %1427 = vmatpush1.msra.mxu0 0.0
    %1428 = vmatprep.subr.mxu0 0.0
    %1429 = vmatpush1.msra.mxu0 0.0
    %1430 = vmatprep.subr.mxu0 0.0
    %1431 = vmatpush1.msra.mxu0 0.0
    %1432 = vmatprep.subr.mxu0 0.0
    %1433 = vmatpush1.msra.mxu0 0.0
    %1434 = vmatprep.subr.mxu0 0.0
    %1435 = vmatpush1.msra.mxu0 0.0
    %1436 = vmatprep.mubr.f32.mxu0 0.0
    %1437 = vmatmul.mubr.f32.gmra.mrb[0].mxu0 %v1370
    %v1438 = vpop.f32.mrb[0].mxu0
    %v1439 = vadd.f32 %v66, %v1438
    %v1440 = vpop.f32.mrb[0].mxu0
    %1441 = vdwg.mxu0
    %v1442 = vxor.u32 %v1439, 2147483648
    %v1443 = vmul.f32 %v1442, 1.442695
    %v1444 = vpow.pop %v1443
    %v1445 = vadd.f32 %v1444, 1.0
    %v1446 = vrcp.pop %v1445
    %v1447 = vmul.f32 1.0, %v1446
    %v1448 = vtanh.pop %v1439
    %v1449 = vmul.f32 %v1447, %v1256
    %1451 = vrot.lane.b32.xlu0 %v1448, 32
    %v1452 = vpop.permute.xlu0 %1451
    %v1454 = vmul.f32 %v1447, %v1452
    %1456 = vrot.lane.b32.xlu0 %v1454, 32
    %v1457 = vpop.permute.xlu0 %1456
    %v1459 = vadd.f32 %v1449, %v1457
    %v1460 = vtanh.pop %v1459
    %1462 = vrot.lane.b32.xlu0 %v1460, 32
    %v1463 = vpop.permute.xlu0 %1462
    %v1465 = vmul.f32 %v1447, %v1463
    %v1466 = vsel %vm241, %v1362, 0
    %1468 = vmatprep.subr.mxu0 0.0
    %1469 = vmatpush1.msra.mxu0 %v49
    %1470 = vmatprep.subr.mxu0 0.0
    %1471 = vmatpush1.msra.mxu0 %v50
    %1472 = vmatprep.subr.mxu0 0.0
    %1473 = vmatpush1.msra.mxu0 %v51
    %1474 = vmatprep.subr.mxu0 0.0
    %1475 = vmatpush1.msra.mxu0 %v52
    %1476 = vmatprep.subr.mxu0 0.0
    %1477 = vmatpush1.msra.mxu0 0.0
    %1478 = vmatprep.subr.mxu0 0.0
    %1479 = vmatpush1.msra.mxu0 0.0
    %1480 = vmatprep.subr.mxu0 0.0
    %1481 = vmatpush1.msra.mxu0 0.0
    %1482 = vmatprep.subr.mxu0 0.0
    %1483 = vmatpush1.msra.mxu0 0.0
    %1484 = vmatprep.subr.mxu0 0.0
    %1485 = vmatpush1.msra.mxu0 0.0
    %1486 = vmatprep.subr.mxu0 0.0
    %1487 = vmatpush1.msra.mxu0 0.0
    %1488 = vmatprep.subr.mxu0 0.0
    %1489 = vmatpush1.msra.mxu0 0.0
    %1490 = vmatprep.subr.mxu0 0.0
    %1491 = vmatpush1.msra.mxu0 0.0
    %1492 = vmatprep.subr.mxu0 0.0
    %1493 = vmatpush1.msra.mxu0 0.0
    %1494 = vmatprep.subr.mxu0 0.0
    %1495 = vmatpush1.msra.mxu0 0.0
    %1496 = vmatprep.subr.mxu0 0.0
    %1497 = vmatpush1.msra.mxu0 0.0
    %1498 = vmatprep.subr.mxu0 0.0
    %1499 = vmatpush1.msra.mxu0 0.0
    %1500 = vmatprep.subr.mxu0 0.0
    %1501 = vmatpush1.msra.mxu0 0.0
    %1502 = vmatprep.subr.mxu0 0.0
    %1503 = vmatpush1.msra.mxu0 0.0
    %1504 = vmatprep.subr.mxu0 0.0
    %1505 = vmatpush1.msra.mxu0 0.0
    %1506 = vmatprep.subr.mxu0 0.0
    %1507 = vmatpush1.msra.mxu0 0.0
    %1508 = vmatprep.subr.mxu0 0.0
    %1509 = vmatpush1.msra.mxu0 0.0
    %1510 = vmatprep.subr.mxu0 0.0
    %1511 = vmatpush1.msra.mxu0 0.0
    %1512 = vmatprep.subr.mxu0 0.0
    %1513 = vmatpush1.msra.mxu0 0.0
    %1514 = vmatprep.subr.mxu0 0.0
    %1515 = vmatpush1.msra.mxu0 0.0
    %1516 = vmatprep.subr.mxu0 0.0
    %1517 = vmatpush1.msra.mxu0 0.0
    %1518 = vmatprep.subr.mxu0 0.0
    %1519 = vmatpush1.msra.mxu0 0.0
    %1520 = vmatprep.subr.mxu0 0.0
    %1521 = vmatpush1.msra.mxu0 0.0
    %1522 = vmatprep.subr.mxu0 0.0
    %1523 = vmatpush1.msra.mxu0 0.0
    %1524 = vmatprep.subr.mxu0 0.0
    %1525 = vmatpush1.msra.mxu0 0.0
    %1526 = vmatprep.subr.mxu0 0.0
    %1527 = vmatpush1.msra.mxu0 0.0
    %1528 = vmatprep.subr.mxu0 0.0
    %1529 = vmatpush1.msra.mxu0 0.0
    %1530 = vmatprep.subr.mxu0 0.0
    %1531 = vmatpush1.msra.mxu0 0.0
    %1532 = vmatprep.mubr.f32.mxu0 0.0
    %1533 = vmatmul.mubr.f32.gmra.mrb[0].mxu0 %v1466
    %v1534 = vpop.f32.mrb[0].mxu0
    %v1535 = vadd.f32 0.0, %v1534
    %v1536 = vpop.f32.mrb[0].mxu0
    %1537 = vdwg.mxu0
    %v1538 = vadd.f32 %v207, %v1535
    %v1539 = vxor.u32 %v1538, 2147483648
    %v1540 = vmul.f32 %v1539, 1.442695
    %v1541 = vpow.pop %v1540
    %v1542 = vadd.f32 %v1541, 1.0
    %v1543 = vrcp.pop %v1542
    %v1544 = vmul.f32 1.0, %v1543
    %v1545 = vtanh.pop %v1538
    %v1546 = vmul.f32 %v1544, %v1353
    %1548 = vrot.lane.b32.xlu0 %v1545, 32
    %v1549 = vpop.permute.xlu0 %1548
    %v1551 = vmul.f32 %v1544, %v1549
    %1553 = vrot.lane.b32.xlu0 %v1551, 32
    %v1554 = vpop.permute.xlu0 %1553
    %v1556 = vadd.f32 %v1546, %v1554
    %v1557 = vtanh.pop %v1556
    %1559 = vrot.lane.b32.xlu0 %v1557, 32
    %v1560 = vpop.permute.xlu0 %1559
    %v1562 = vmul.f32 %v1544, %v1560
    %1564 = vrot.lane.b32.xlu0 %v1562, 64
    %v1565 = vpop.permute.xlu0 %1564
    %1568 = vrot.lane.b32.xlu0 %v1465, 96
    %v1569 = vpop.permute.xlu0 %1568
    %v1571 = vsel %vm241, %v1565, %v1569
    %v1573 = vsel %vm350, %v1571, 0
    %1575 = vmatprep.subr.mxu0 0.0
    %1576 = vmatpush1.msra.mxu0 %v53
    %1577 = vmatprep.subr.mxu0 0.0
    %1578 = vmatpush1.msra.mxu0 %v54
    %1579 = vmatprep.subr.mxu0 0.0
    %1580 = vmatpush1.msra.mxu0 %v55
    %1581 = vmatprep.subr.mxu0 0.0
    %1582 = vmatpush1.msra.mxu0 %v56
    %1583 = vmatprep.subr.mxu0 0.0
    %1584 = vmatpush1.msra.mxu0 %v57
    %1585 = vmatprep.subr.mxu0 0.0
    %1586 = vmatpush1.msra.mxu0 %v58
    %1587 = vmatprep.subr.mxu0 0.0
    %1588 = vmatpush1.msra.mxu0 %v59
    %1589 = vmatprep.subr.mxu0 0.0
    %1590 = vmatpush1.msra.mxu0 %v60
    %1591 = vmatprep.subr.mxu0 0.0
    %1592 = vmatpush1.msra.mxu0 0.0
    %1593 = vmatprep.subr.mxu0 0.0
    %1594 = vmatpush1.msra.mxu0 0.0
    %1595 = vmatprep.subr.mxu0 0.0
    %1596 = vmatpush1.msra.mxu0 0.0
    %1597 = vmatprep.subr.mxu0 0.0
    %1598 = vmatpush1.msra.mxu0 0.0
    %1599 = vmatprep.subr.mxu0 0.0
    %1600 = vmatpush1.msra.mxu0 0.0
    %1601 = vmatprep.subr.mxu0 0.0
    %1602 = vmatpush1.msra.mxu0 0.0
    %1603 = vmatprep.subr.mxu0 0.0
    %1604 = vmatpush1.msra.mxu0 0.0
    %1605 = vmatprep.subr.mxu0 0.0
    %1606 = vmatpush1.msra.mxu0 0.0
    %1607 = vmatprep.subr.mxu0 0.0
    %1608 = vmatpush1.msra.mxu0 0.0
    %1609 = vmatprep.subr.mxu0 0.0
    %1610 = vmatpush1.msra.mxu0 0.0
    %1611 = vmatprep.subr.mxu0 0.0
    %1612 = vmatpush1.msra.mxu0 0.0
    %1613 = vmatprep.subr.mxu0 0.0
    %1614 = vmatpush1.msra.mxu0 0.0
    %1615 = vmatprep.subr.mxu0 0.0
    %1616 = vmatpush1.msra.mxu0 0.0
    %1617 = vmatprep.subr.mxu0 0.0
    %1618 = vmatpush1.msra.mxu0 0.0
    %1619 = vmatprep.subr.mxu0 0.0
    %1620 = vmatpush1.msra.mxu0 0.0
    %1621 = vmatprep.subr.mxu0 0.0
    %1622 = vmatpush1.msra.mxu0 0.0
    %1623 = vmatprep.subr.mxu0 0.0
    %1624 = vmatpush1.msra.mxu0 0.0
    %1625 = vmatprep.subr.mxu0 0.0
    %1626 = vmatpush1.msra.mxu0 0.0
    %1627 = vmatprep.subr.mxu0 0.0
    %1628 = vmatpush1.msra.mxu0 0.0
    %1629 = vmatprep.subr.mxu0 0.0
    %1630 = vmatpush1.msra.mxu0 0.0
    %1631 = vmatprep.subr.mxu0 0.0
    %1632 = vmatpush1.msra.mxu0 0.0
    %1633 = vmatprep.subr.mxu0 0.0
    %1634 = vmatpush1.msra.mxu0 0.0
    %1635 = vmatprep.subr.mxu0 0.0
    %1636 = vmatpush1.msra.mxu0 0.0
    %1637 = vmatprep.subr.mxu0 0.0
    %1638 = vmatpush1.msra.mxu0 0.0
    %1639 = vmatprep.mubr.f32.mxu0 0.0
    %1640 = vmatmul.mubr.f32.gmra.mrb[0].mxu0 %v1573
    %v1641 = vpop.f32.mrb[0].mxu0
    %v1642 = vadd.f32 %v66, %v1641
    %v1643 = vpop.f32.mrb[0].mxu0
    %1644 = vdwg.mxu0
    %v1645 = vxor.u32 %v1642, 2147483648
    %v1646 = vmul.f32 %v1645, 1.442695
    %v1647 = vpow.pop %v1646
    %v1648 = vadd.f32 %v1647, 1.0
    %v1649 = vrcp.pop %v1648
    %v1650 = vmul.f32 1.0, %v1649
    %v1651 = vtanh.pop %v1642
    %v1652 = vmul.f32 %v1650, %v1459
    %1654 = vrot.lane.b32.xlu0 %v1651, 32
    %v1655 = vpop.permute.xlu0 %1654
    %v1657 = vmul.f32 %v1650, %v1655
    %1659 = vrot.lane.b32.xlu0 %v1657, 32
    %v1660 = vpop.permute.xlu0 %1659
    %v1662 = vadd.f32 %v1652, %v1660
    %v1663 = vtanh.pop %v1662
    %1665 = vrot.lane.b32.xlu0 %v1663, 32
    %v1666 = vpop.permute.xlu0 %1665
    %v1668 = vmul.f32 %v1650, %v1666
    %v1669 = vsel %vm241, %v1565, 0
    %1671 = vmatprep.subr.mxu0 0.0
    %1672 = vmatpush1.msra.mxu0 %v49
    %1673 = vmatprep.subr.mxu0 0.0
    %1674 = vmatpush1.msra.mxu0 %v50
    %1675 = vmatprep.subr.mxu0 0.0
    %1676 = vmatpush1.msra.mxu0 %v51
    %1677 = vmatprep.subr.mxu0 0.0
    %1678 = vmatpush1.msra.mxu0 %v52
    %1679 = vmatprep.subr.mxu0 0.0
    %1680 = vmatpush1.msra.mxu0 0.0
    %1681 = vmatprep.subr.mxu0 0.0
    %1682 = vmatpush1.msra.mxu0 0.0
    %1683 = vmatprep.subr.mxu0 0.0
    %1684 = vmatpush1.msra.mxu0 0.0
    %1685 = vmatprep.subr.mxu0 0.0
    %1686 = vmatpush1.msra.mxu0 0.0
    %1687 = vmatprep.subr.mxu0 0.0
    %1688 = vmatpush1.msra.mxu0 0.0
    %1689 = vmatprep.subr.mxu0 0.0
    %1690 = vmatpush1.msra.mxu0 0.0
    %1691 = vmatprep.subr.mxu0 0.0
    %1692 = vmatpush1.msra.mxu0 0.0
    %1693 = vmatprep.subr.mxu0 0.0
    %1694 = vmatpush1.msra.mxu0 0.0
    %1695 = vmatprep.subr.mxu0 0.0
    %1696 = vmatpush1.msra.mxu0 0.0
    %1697 = vmatprep.subr.mxu0 0.0
    %1698 = vmatpush1.msra.mxu0 0.0
    %1699 = vmatprep.subr.mxu0 0.0
    %1700 = vmatpush1.msra.mxu0 0.0
    %1701 = vmatprep.subr.mxu0 0.0
    %1702 = vmatpush1.msra.mxu0 0.0
    %1703 = vmatprep.subr.mxu0 0.0
    %1704 = vmatpush1.msra.mxu0 0.0
    %1705 = vmatprep.subr.mxu0 0.0
    %1706 = vmatpush1.msra.mxu0 0.0
    %1707 = vmatprep.subr.mxu0 0.0
    %1708 = vmatpush1.msra.mxu0 0.0
    %1709 = vmatprep.subr.mxu0 0.0
    %1710 = vmatpush1.msra.mxu0 0.0
    %1711 = vmatprep.subr.mxu0 0.0
    %1712 = vmatpush1.msra.mxu0 0.0
    %1713 = vmatprep.subr.mxu0 0.0
    %1714 = vmatpush1.msra.mxu0 0.0
    %1715 = vmatprep.subr.mxu0 0.0
    %1716 = vmatpush1.msra.mxu0 0.0
    %1717 = vmatprep.subr.mxu0 0.0
    %1718 = vmatpush1.msra.mxu0 0.0
    %1719 = vmatprep.subr.mxu0 0.0
    %1720 = vmatpush1.msra.mxu0 0.0
    %1721 = vmatprep.subr.mxu0 0.0
    %1722 = vmatpush1.msra.mxu0 0.0
    %1723 = vmatprep.subr.mxu0 0.0
    %1724 = vmatpush1.msra.mxu0 0.0
    %1725 = vmatprep.subr.mxu0 0.0
    %1726 = vmatpush1.msra.mxu0 0.0
    %1727 = vmatprep.subr.mxu0 0.0
    %1728 = vmatpush1.msra.mxu0 0.0
    %1729 = vmatprep.subr.mxu0 0.0
    %1730 = vmatpush1.msra.mxu0 0.0
    %1731 = vmatprep.subr.mxu0 0.0
    %1732 = vmatpush1.msra.mxu0 0.0
    %1733 = vmatprep.subr.mxu0 0.0
    %1734 = vmatpush1.msra.mxu0 0.0
    %1735 = vmatprep.mubr.f32.mxu0 0.0
    %1736 = vmatmul.mubr.f32.gmra.mrb[0].mxu0 %v1669
    %v1737 = vpop.f32.mrb[0].mxu0
    %v1738 = vadd.f32 0.0, %v1737
    %v1739 = vpop.f32.mrb[0].mxu0
    %1740 = vdwg.mxu0
    %v1741 = vadd.f32 %v212, %v1738
    %v1742 = vxor.u32 %v1741, 2147483648
    %v1743 = vmul.f32 %v1742, 1.442695
    %v1744 = vpow.pop %v1743
    %v1745 = vadd.f32 %v1744, 1.0
    %v1746 = vrcp.pop %v1745
    %v1747 = vmul.f32 1.0, %v1746
    %v1748 = vtanh.pop %v1741
    %v1749 = vmul.f32 %v1747, %v1556
    %1751 = vrot.lane.b32.xlu0 %v1748, 32
    %v1752 = vpop.permute.xlu0 %1751
    %v1754 = vmul.f32 %v1747, %v1752
    %1756 = vrot.lane.b32.xlu0 %v1754, 32
    %v1757 = vpop.permute.xlu0 %1756
    %v1759 = vadd.f32 %v1749, %v1757
    %v1760 = vtanh.pop %v1759
    %1762 = vrot.lane.b32.xlu0 %v1760, 32
    %v1763 = vpop.permute.xlu0 %1762
    %v1765 = vmul.f32 %v1747, %v1763
    %1767 = vrot.lane.b32.xlu0 %v1765, 64
    %v1768 = vpop.permute.xlu0 %1767
    %1771 = vrot.lane.b32.xlu0 %v1668, 96
    %v1772 = vpop.permute.xlu0 %1771
    %v1774 = vsel %vm241, %v1768, %v1772
    %v1776 = vsel %vm350, %v1774, 0
    %1778 = vmatprep.subr.mxu0 0.0
    %1779 = vmatpush1.msra.mxu0 %v53
    %1780 = vmatprep.subr.mxu0 0.0
    %1781 = vmatpush1.msra.mxu0 %v54
    %1782 = vmatprep.subr.mxu0 0.0
    %1783 = vmatpush1.msra.mxu0 %v55
    %1784 = vmatprep.subr.mxu0 0.0
    %1785 = vmatpush1.msra.mxu0 %v56
    %1786 = vmatprep.subr.mxu0 0.0
    %1787 = vmatpush1.msra.mxu0 %v57
    %1788 = vmatprep.subr.mxu0 0.0
    %1789 = vmatpush1.msra.mxu0 %v58
    %1790 = vmatprep.subr.mxu0 0.0
    %1791 = vmatpush1.msra.mxu0 %v59
    %1792 = vmatprep.subr.mxu0 0.0
    %1793 = vmatpush1.msra.mxu0 %v60
    %1794 = vmatprep.subr.mxu0 0.0
    %1795 = vmatpush1.msra.mxu0 0.0
    %1796 = vmatprep.subr.mxu0 0.0
    %1797 = vmatpush1.msra.mxu0 0.0
    %1798 = vmatprep.subr.mxu0 0.0
    %1799 = vmatpush1.msra.mxu0 0.0
    %1800 = vmatprep.subr.mxu0 0.0
    %1801 = vmatpush1.msra.mxu0 0.0
    %1802 = vmatprep.subr.mxu0 0.0
    %1803 = vmatpush1.msra.mxu0 0.0
    %1804 = vmatprep.subr.mxu0 0.0
    %1805 = vmatpush1.msra.mxu0 0.0
    %1806 = vmatprep.subr.mxu0 0.0
    %1807 = vmatpush1.msra.mxu0 0.0
    %1808 = vmatprep.subr.mxu0 0.0
    %1809 = vmatpush1.msra.mxu0 0.0
    %1810 = vmatprep.subr.mxu0 0.0
    %1811 = vmatpush1.msra.mxu0 0.0
    %1812 = vmatprep.subr.mxu0 0.0
    %1813 = vmatpush1.msra.mxu0 0.0
    %1814 = vmatprep.subr.mxu0 0.0
    %1815 = vmatpush1.msra.mxu0 0.0
    %1816 = vmatprep.subr.mxu0 0.0
    %1817 = vmatpush1.msra.mxu0 0.0
    %1818 = vmatprep.subr.mxu0 0.0
    %1819 = vmatpush1.msra.mxu0 0.0
    %1820 = vmatprep.subr.mxu0 0.0
    %1821 = vmatpush1.msra.mxu0 0.0
    %1822 = vmatprep.subr.mxu0 0.0
    %1823 = vmatpush1.msra.mxu0 0.0
    %1824 = vmatprep.subr.mxu0 0.0
    %1825 = vmatpush1.msra.mxu0 0.0
    %1826 = vmatprep.subr.mxu0 0.0
    %1827 = vmatpush1.msra.mxu0 0.0
    %1828 = vmatprep.subr.mxu0 0.0
    %1829 = vmatpush1.msra.mxu0 0.0
    %1830 = vmatprep.subr.mxu0 0.0
    %1831 = vmatpush1.msra.mxu0 0.0
    %1832 = vmatprep.subr.mxu0 0.0
    %1833 = vmatpush1.msra.mxu0 0.0
    %1834 = vmatprep.subr.mxu0 0.0
    %1835 = vmatpush1.msra.mxu0 0.0
    %1836 = vmatprep.subr.mxu0 0.0
    %1837 = vmatpush1.msra.mxu0 0.0
    %1838 = vmatprep.subr.mxu0 0.0
    %1839 = vmatpush1.msra.mxu0 0.0
    %1840 = vmatprep.subr.mxu0 0.0
    %1841 = vmatpush1.msra.mxu0 0.0
    %1842 = vmatprep.mubr.f32.mxu0 0.0
    %1843 = vmatmul.mubr.f32.gmra.mrb[0].mxu0 %v1776
    %v1844 = vpop.f32.mrb[0].mxu0
    %v1845 = vadd.f32 %v66, %v1844
    %v1846 = vpop.f32.mrb[0].mxu0
    %1847 = vdwg.mxu0
    %v1848 = vxor.u32 %v1845, 2147483648
    %v1849 = vmul.f32 %v1848, 1.442695
    %v1850 = vpow.pop %v1849
    %v1851 = vadd.f32 %v1850, 1.0
    %v1852 = vrcp.pop %v1851
    %v1853 = vmul.f32 1.0, %v1852
    %v1854 = vtanh.pop %v1845
    %v1855 = vmul.f32 %v1853, %v1662
    %1857 = vrot.lane.b32.xlu0 %v1854, 32
    %v1858 = vpop.permute.xlu0 %1857
    %v1860 = vmul.f32 %v1853, %v1858
    %1862 = vrot.lane.b32.xlu0 %v1860, 32
    %v1863 = vpop.permute.xlu0 %1862
    %v1865 = vadd.f32 %v1855, %v1863
    %v1866 = vtanh.pop %v1865
    %1868 = vrot.lane.b32.xlu0 %v1866, 32
    %v1869 = vpop.permute.xlu0 %1868
    %v1871 = vmul.f32 %v1853, %v1869
    %v1872 = vld [vmem:[%s8] sm:$0xff]
    %v1873 = vld [vmem:[%s8 + $0x8] sm:$0xff]
    %v1874 = vld [vmem:[%s8 + $0x10] sm:$0xff]
    %v1875 = vld [vmem:[%s8 + $0x18] sm:$0xff]
    %v1876 = vld [vmem:[%s9] sm:$0x1]
    %v1878 = vlaneseq
    %v1879 = vshrl.u32 %v1878, 7
    %v1880 = vsub.s32 0, %v1879
    %v1881 = vrot.slane %v1876, %v1880
    %1884 = vrot.lane.b32.xlu0 %v1871, 64
    %v1885 = vpop.permute.xlu0 %1884
    %v1886 = vsel %vm241, %v1885, 0
    %1888 = vmatprep.subr.mxu0 0.0
    %1889 = vmatpush1.msra.mxu0 %v1872
    %1890 = vmatprep.subr.mxu0 0.0
    %1891 = vmatpush1.msra.mxu0 %v1873
    %1892 = vmatprep.subr.mxu0 0.0
    %1893 = vmatpush1.msra.mxu0 %v1874
    %1894 = vmatprep.subr.mxu0 0.0
    %1895 = vmatpush1.msra.mxu0 %v1875
    %1896 = vmatprep.subr.mxu0 0.0
    %1897 = vmatpush1.msra.mxu0 0.0
    %1898 = vmatprep.subr.mxu0 0.0
    %1899 = vmatpush1.msra.mxu0 0.0
    %1900 = vmatprep.subr.mxu0 0.0
    %1901 = vmatpush1.msra.mxu0 0.0
    %1902 = vmatprep.subr.mxu0 0.0
    %1903 = vmatpush1.msra.mxu0 0.0
    %1904 = vmatprep.subr.mxu0 0.0
    %1905 = vmatpush1.msra.mxu0 0.0
    %1906 = vmatprep.subr.mxu0 0.0
    %1907 = vmatpush1.msra.mxu0 0.0
    %1908 = vmatprep.subr.mxu0 0.0
    %1909 = vmatpush1.msra.mxu0 0.0
    %1910 = vmatprep.subr.mxu0 0.0
    %1911 = vmatpush1.msra.mxu0 0.0
    %1912 = vmatprep.subr.mxu0 0.0
    %1913 = vmatpush1.msra.mxu0 0.0
    %1914 = vmatprep.subr.mxu0 0.0
    %1915 = vmatpush1.msra.mxu0 0.0
    %1916 = vmatprep.subr.mxu0 0.0
    %1917 = vmatpush1.msra.mxu0 0.0
    %1918 = vmatprep.subr.mxu0 0.0
    %1919 = vmatpush1.msra.mxu0 0.0
    %1920 = vmatprep.subr.mxu0 0.0
    %1921 = vmatpush1.msra.mxu0 0.0
    %1922 = vmatprep.subr.mxu0 0.0
    %1923 = vmatpush1.msra.mxu0 0.0
    %1924 = vmatprep.subr.mxu0 0.0
    %1925 = vmatpush1.msra.mxu0 0.0
    %1926 = vmatprep.subr.mxu0 0.0
    %1927 = vmatpush1.msra.mxu0 0.0
    %1928 = vmatprep.subr.mxu0 0.0
    %1929 = vmatpush1.msra.mxu0 0.0
    %1930 = vmatprep.subr.mxu0 0.0
    %1931 = vmatpush1.msra.mxu0 0.0
    %1932 = vmatprep.subr.mxu0 0.0
    %1933 = vmatpush1.msra.mxu0 0.0
    %1934 = vmatprep.subr.mxu0 0.0
    %1935 = vmatpush1.msra.mxu0 0.0
    %1936 = vmatprep.subr.mxu0 0.0
    %1937 = vmatpush1.msra.mxu0 0.0
    %1938 = vmatprep.subr.mxu0 0.0
    %1939 = vmatpush1.msra.mxu0 0.0
    %1940 = vmatprep.subr.mxu0 0.0
    %1941 = vmatpush1.msra.mxu0 0.0
    %1942 = vmatprep.subr.mxu0 0.0
    %1943 = vmatpush1.msra.mxu0 0.0
    %1944 = vmatprep.subr.mxu0 0.0
    %1945 = vmatpush1.msra.mxu0 0.0
    %1946 = vmatprep.subr.mxu0 0.0
    %1947 = vmatpush1.msra.mxu0 0.0
    %1948 = vmatprep.subr.mxu0 0.0
    %1949 = vmatpush1.msra.mxu0 0.0
    %1950 = vmatprep.subr.mxu0 0.0
    %1951 = vmatpush1.msra.mxu0 0.0
    %1952 = vmatprep.mubr.f32.mxu0 0.0
    %1953 = vmatmul.mubr.f32.gmra.mrb[0].mxu0 %v1886
    %v1954 = vpop.f32.mrb[0].mxu0
    %v1955 = vadd.f32 %v1881, %v1954
    %v1956 = vpop.f32.mrb[0].mxu0
    %1957 = vdwg.mxu0
    %vm1958 = vcmask 64512
    %1959 = vst.msk [vmem:[%s10] sm:$0xff] %vm1958, %v1955
    // Predicated region
    $region46: #{_forward_impl.1} parent=1 // pred_check
      _
    $region47: #{_forward_impl.1} parent=1 // pred_check_branch
      %1961 = sbr.rel (0) target = $region49
    $region48: #{_forward_impl.1} parent=1 // pred_region
      _
    $region49: #{_forward_impl.1} parent=1 // pred_fallthru
      _
    // Predicated region
    $region50: #{_forward_impl.1} parent=1 // pred_check
      _
    $region51: #{_forward_impl.1} parent=1 // pred_check_branch
      %1963 = sbr.rel (0) target = $region53
    $region52: #{_forward_impl.1} parent=1 // pred_region
      _
    $region53: #{_forward_impl.1} parent=1 // pred_fallthru
      _
    %1964 = vsyncpa [#allocation3], 1

</llo_original>
